<compile_context>
chip_gen: v7x
topology: tpu7x:2x2x1
jax: 0.10.0
libtpu: 0.0.40
codegen_flags: <defaults>
</compile_context>

<pallas_src>
import jax
import jax.numpy as jnp
from jax.experimental import pallas as pl
from jax.experimental.pallas import tpu as pltpu


# ----------------------------------------------------------------------------
# Fused kernel: 1x1 conv (MXU) -> dw 3x3 (VPU + XLU rolls) -> folded BN -> ReLU
# ----------------------------------------------------------------------------
def _lightconv3x3_kernel(x_top_ref, x_mid_ref, x_bot_ref, w1_ref, wdw_ref,
                         bias_ref, o_ref, ys_ref):
    # Per-grid-step views (grid = (N, H // block_h)):
    #   x_top_ref : (1, 1, W, Cin)    input row  block_h*t - 1 (clamped at 0)
    #   x_mid_ref : (1, TH, W, Cin)   input rows [block_h*t, block_h*(t+1))
    #   x_bot_ref : (1, 1, W, Cin)    input row  block_h*(t+1) (clamped at H-1)
    #   w1_ref    : (Cin, Cout)       bf16 1x1 weights
    #   wdw_ref   : (9, Cout)         f32 depthwise weights * BN scale, k=3*dy+dx
    #   bias_ref  : (1, Cout)         f32 folded BatchNorm bias
    #   o_ref     : (1, TH, W, Cout)
    #   ys_ref    : (TH+2, W, Cout)   f32 scratch: 1x1 output, padded along H only
    th2, w, cout = ys_ref.shape
    th = th2 - 2
    cin = x_mid_ref.shape[-1]

    t = pl.program_id(1)
    last_t = pl.num_programs(1) - 1

    w1 = w1_ref[...]                                        # (Cin, Cout) bf16

    # ---- 1x1 conv: one big MXU matmul for the tile + one small matmul for the
    # ---- two halo rows (concatenated -> single push/drain instead of two).
    x_mid = x_mid_ref[...].reshape(th * w, cin).astype(jnp.bfloat16)
    y_mid = jnp.dot(x_mid, w1, preferred_element_type=jnp.float32)

    x_halo = jnp.concatenate([x_top_ref[...], x_bot_ref[...]], axis=1)
    x_halo = x_halo.reshape(2 * w, cin).astype(jnp.bfloat16)
    y_halo = jnp.dot(x_halo, w1, preferred_element_type=jnp.float32)

    # ---- assemble the H-padded 1x1 output in VMEM.  Width stays W (8-aligned)
    # ---- so every slice below is a cheap major-dim slice.  Image borders use
    # ---- zero rows via a multiplicative scalar gate; every scratch region is
    # ---- fully rewritten every step (safe under megacore grid sharding).
    ys_ref[1:th + 1, :, :] = y_mid.reshape(th, w, cout)
    top_gate = (t > 0).astype(jnp.float32)                  # 0 at the image top
    bot_gate = (t < last_t).astype(jnp.float32)             # 0 at the image bottom
    ys_ref[0:1, :, :] = y_halo[:w].reshape(1, w, cout) * top_gate
    ys_ref[th + 1:th + 2, :, :] = y_halo[w:].reshape(1, w, cout) * bot_gate

    # ---- depthwise 3x3 + folded BN + ReLU ------------------------------------
    wdw = wdw_ref[...]                                      # (9, Cout), hoisted load
    bias = bias_ref[...].reshape(1, 1, cout)

    r0 = ys_ref[0:th, :, :]                                 # rows y-1
    r1 = ys_ref[1:th + 1, :, :]                             # rows y
    r2 = ys_ref[2:th + 2, :, :]                             # rows y+1

    # Center column (dx = 1); BN bias fused into the first accumulate.
    acc = r0 * wdw[1] + r1 * wdw[4] + r2 * wdw[7] + bias

    col = jax.lax.broadcasted_iota(jnp.int32, (th, w, cout), 1)

    # Left neighbour (dx = 0, tap x-1): shift right by one column (XLU roll),
    # zero the wrapped column 0.
    left = r0 * wdw[0] + r1 * wdw[3] + r2 * wdw[6]
    left = pltpu.roll(left, shift=1, axis=1)
    acc = acc + jnp.where(col == 0, 0.0, left)

    # Right neighbour (dx = 2, tap x+1): shift left by one column (roll by W-1),
    # zero the wrapped column W-1.
    right = r0 * wdw[2] + r1 * wdw[5] + r2 * wdw[8]
    right = pltpu.roll(right, shift=w - 1, axis=1)
    acc = acc + jnp.where(col == w - 1, 0.0, right)

    o_ref[...] = jnp.maximum(acc, 0.0).astype(o_ref.dtype).reshape(1, th, w, cout)


# ----------------------------------------------------------------------------
# Tile-size selection: VMEM-byte budget + pipelining heuristics
# ----------------------------------------------------------------------------
def _vmem_bytes_estimate(block_h, w, cin, cout, x_itemsize, out_itemsize):
    in_tile = 2 * (block_h + 2) * w * cin * x_itemsize      # double-buffered input (mid + halos)
    out_tile = 2 * block_h * w * cout * out_itemsize        # double-buffered output
    scratch = (block_h + 2) * w * cout * 4                  # f32 1x1 scratch
    weights = cin * cout * 2 + 16 * cout * 4                # resident weights (approx)
    return in_tile + out_tile + scratch + weights


def _pick_block_h(n, h, w, cin, cout, x_itemsize, out_itemsize,
                  vmem_budget_bytes=20 * 1024 * 1024,
                  min_grid_steps=8, target_mxu_rows=512):
    """Pick block_h so that:
       * 2x input tile + 2x output tile + f32 scratch stay under the budget
         (conservative for v7x's 64 MiB physical VMEM, v5e's small default),
       * each step's MXU matmul has >= ~512 rows (amortizes cadence/step cost),
       * there are >= min_grid_steps grid steps for DMA/compute overlap and
         for v7x's two TensorCores, when achievable without starving the MXU.
    """
    divisors = [d for d in range(1, h + 1) if h % d == 0]
    fitting = [d for d in divisors
               if _vmem_bytes_estimate(d, w, cin, cout, x_itemsize,
                                       out_itemsize) <= vmem_budget_bytes]
    if not fitting:
        fitting = divisors[:1]
    block_h = fitting[-1]
    for d in reversed(fitting):                      # largest tile first
        if d * w < min(target_mxu_rows, h * w):
            break                                    # don't starve the MXU further
        block_h = d
        if n * (h // d) >= min_grid_steps:
            break                                    # enough steps to pipeline / shard
    return block_h


# ----------------------------------------------------------------------------
# Wrappers
# ----------------------------------------------------------------------------
def light_conv3x3_nhwc(x, params, *, block_h=None, out_dtype=jnp.float32):
    """Fused LightConv3x3 on NHWC activations (channels on lanes).

    x: (N, H, W, Cin), float32 or bfloat16.  Returns (N, H, W, Cout) out_dtype.
    No HBM-side transposes or casts are performed here; keep activations NHWC
    (and ideally bf16) end-to-end across layers.  Use out_dtype=jnp.bfloat16 to
    halve the output HBM stream (recommended on v7x).
    """
    n, h, w, cin = x.shape
    w1 = params["w1"]                                       # (Cin, Cout)
    cout = w1.shape[1]

    # Copy-free (TH, W) -> TH*W merge in front of the MXU requires W to be a
    # multiple of the sublane packing of x's dtype (8 for f32, 16 for bf16).
    sublane_pack = 8 * 4 // jnp.dtype(x.dtype).itemsize
    assert w % sublane_pack == 0, (
        f"W={w} must be a multiple of {sublane_pack} for {x.dtype} inputs")

    if block_h is None:
        block_h = _pick_block_h(n, h, w, cin, cout,
                                jnp.dtype(x.dtype).itemsize,
                                jnp.dtype(out_dtype).itemsize)
    assert h % block_h == 0, "block_h must divide H"

    # bf16 1x1 weights for the MXU; BN scale folded into the depthwise weights;
    # BN bias passed separately (initializes the dw accumulator).
    w1_bf = w1.astype(jnp.bfloat16)
    scale = params["scale"].reshape(1, cout).astype(jnp.float32)
    wdw9 = params["wdw"].reshape(9, cout).astype(jnp.float32) * scale
    bias = params["bias"].reshape(1, cout).astype(jnp.float32)

    grid = (n, h // block_h)
    top_map = lambda i, t: (i, jnp.maximum(t * block_h - 1, 0), 0, 0)
    mid_map = lambda i, t: (i, t, 0, 0)
    bot_map = lambda i, t: (i, jnp.minimum((t + 1) * block_h, h - 1), 0, 0)
    rep_map = lambda i, t: (0, 0)

    return pl.pallas_call(
        _lightconv3x3_kernel,
        grid=grid,
        in_specs=[
            pl.BlockSpec((1, 1, w, cin), top_map),          # halo row above the tile
            pl.BlockSpec((1, block_h, w, cin), mid_map),    # main tile rows
            pl.BlockSpec((1, 1, w, cin), bot_map),          # halo row below the tile
            pl.BlockSpec((cin, cout), rep_map),             # 1x1 weights (resident)
            pl.BlockSpec((9, cout), rep_map),               # dw weights * BN scale
            pl.BlockSpec((1, cout), rep_map),               # BN bias
        ],
        out_specs=pl.BlockSpec((1, block_h, w, cout), lambda i, t: (i, t, 0, 0)),
        out_shape=jax.ShapeDtypeStruct((n, h, w, cout), out_dtype),
        scratch_shapes=[pltpu.VMEM((block_h + 2, w, cout), jnp.float32)],
        compiler_params=pltpu.CompilerParams(
            dimension_semantics=("parallel", "parallel"),
            vmem_limit_bytes=48 * 1024 * 1024),
    )(x, x, x, w1_bf, wdw9, bias)


def light_conv3x3_nchw(x_nchw, params, **kwargs):
    """PyTorch-layout (NCHW) convenience wrapper.

    The transposes here are full HBM passes; for production, keep activations
    NHWC end-to-end and call light_conv3x3_nhwc directly.
    """
    x = jnp.transpose(x_nchw, (0, 2, 3, 1))
    y = light_conv3x3_nhwc(x, params, **kwargs)
    return jnp.transpose(y, (0, 3, 1, 2))


# ----------------------------------------------------------------------------
# Deterministic parameters (BN folded into per-channel scale/bias, eval mode)
# ----------------------------------------------------------------------------
def make_params(key, in_ch, out_ch, eps=1e-5):
    ks = jax.random.split(key, 6)
    w1 = 0.1 * jax.random.normal(ks[0], (in_ch, out_ch), jnp.float32)
    wdw = 0.1 * jax.random.normal(ks[1], (3, 3, 1, out_ch), jnp.float32)
    gamma = 1.0 + 0.1 * jax.random.normal(ks[2], (out_ch,), jnp.float32)
    beta = 0.1 * jax.random.normal(ks[3], (out_ch,), jnp.float32)
    mean = 0.1 * jax.random.normal(ks[4], (out_ch,), jnp.float32)
    var = 0.5 + jax.random.uniform(ks[5], (out_ch,), jnp.float32)
    scale = gamma / jnp.sqrt(var + eps)
    bias = beta - mean * scale
    return {"w1": w1, "wdw": wdw, "scale": scale, "bias": bias}


# Pure-JAX NHWC reference (same bf16 cast on the 1x1 matmul as the kernel).
def reference_lightconv3x3_nhwc(x, p):
    y = jnp.einsum("nhwc,cd->nhwd",
                   x.astype(jnp.bfloat16), p["w1"].astype(jnp.bfloat16),
                   preferred_element_type=jnp.float32)
    n, h, w, c = y.shape
    yp = jnp.pad(y, ((0, 0), (1, 1), (1, 1), (0, 0)))
    z = jnp.zeros_like(y)
    for dy in range(3):
        for dx in range(3):
            z = z + yp[:, dy:dy + h, dx:dx + w, :] * p["wdw"][dy, dx, 0]
    return jnp.maximum(z * p["scale"] + p["bias"], 0.0)


if __name__ == "__main__":
    key = jax.random.PRNGKey(0)
    kx, kp = jax.random.split(key)

    N, Cin, H, W = 2, 16, 16, 16
    Cout = 32

    x_nhwc = jax.random.normal(kx, (N, H, W, Cin), jnp.float32)
    params = make_params(kp, Cin, Cout)

    ref = reference_lightconv3x3_nhwc(x_nhwc, params)

    # block_h=8 exercises interior tiles plus both border-halo paths;
    # block_h=None exercises the VMEM/pipeline-aware auto pick (single tile here).
    for bh in (8, None):
        out = light_conv3x3_nhwc(x_nhwc, params, block_h=bh)
        jax.block_until_ready(out)
        assert out.shape == (N, H, W, Cout)
        assert bool(jnp.all(out >= 0.0))                    # final ReLU
        err = float(jnp.max(jnp.abs(out - ref)))
        assert err < 5e-3, f"block_h={bh}: max abs err {err}"

    # PyTorch-layout (NCHW) interface parity check.
    x_nchw = jnp.transpose(x_nhwc, (0, 3, 1, 2))
    out_nchw = light_conv3x3_nchw(x_nchw, params)
    jax.block_until_ready(out_nchw)
    err = float(jnp.max(jnp.abs(out_nchw - jnp.transpose(ref, (0, 3, 1, 2)))))
    assert err < 5e-3, f"NCHW wrapper: max abs err {err}"

    print("KERNEL_OK")
</pallas_src>

<mosaic_0001>
module attributes {stable_mosaic.version = 11 : i64} {
  func.func @_lightconv3x3_kernel(%arg0: i32, %arg1: i32, %arg2: memref<1x1x16x16xf32, #tpu.memory_space<vmem>>, %arg3: memref<1x8x16x16xf32, #tpu.memory_space<vmem>>, %arg4: memref<1x1x16x16xf32, #tpu.memory_space<vmem>>, %arg5: memref<16x32xbf16, #tpu.memory_space<vmem>>, %arg6: memref<9x32xf32, #tpu.memory_space<vmem>>, %arg7: memref<1x32xf32, #tpu.memory_space<vmem>>, %arg8: memref<1x8x16x32xf32, #tpu.memory_space<vmem>>, %arg9: memref<10x16x32xf32, #tpu.memory_space<vmem>>) attributes {dimension_semantics = [#tpu.dimension_semantics<parallel>, #tpu.dimension_semantics<parallel>], iteration_bounds = array<i64: 2, 2>, scalar_prefetch = 0 : i64, scratch_operands = 1 : i64, tpu.core_type = #tpu.core_type<tc>, window_params = [{transform_indices = @transform_0, window_bounds = array<i64: 1, 1, 16, 16>}, {transform_indices = @transform_1, window_bounds = array<i64: 1, 8, 16, 16>}, {transform_indices = @transform_2, window_bounds = array<i64: 1, 1, 16, 16>}, {pipeline_mode = #tpu.pipeline_mode<synchronous>, transform_indices = @transform_3, window_bounds = array<i64: 16, 32>}, {pipeline_mode = #tpu.pipeline_mode<synchronous>, transform_indices = @transform_4, window_bounds = array<i64: 9, 32>}, {pipeline_mode = #tpu.pipeline_mode<synchronous>, transform_indices = @transform_5, window_bounds = array<i64: 1, 32>}, {transform_indices = @transform_6, window_bounds = array<i64: 1, 8, 16, 32>}]} {
    %c0 = arith.constant 0 : index
    %c0_0 = arith.constant 0 : index
    %0 = vector.load %arg5[%c0, %c0_0] : memref<16x32xbf16, #tpu.memory_space<vmem>>, vector<16x32xbf16>
    %c0_1 = arith.constant 0 : index
    %c0_2 = arith.constant 0 : index
    %c0_3 = arith.constant 0 : index
    %c0_4 = arith.constant 0 : index
    %1 = vector.load %arg3[%c0_1, %c0_2, %c0_3, %c0_4] : memref<1x8x16x16xf32, #tpu.memory_space<vmem>>, vector<1x8x16x16xf32>
    %2 = vector.shape_cast %1 : vector<1x8x16x16xf32> to vector<128x16xf32>
    %3 = arith.truncf %2 : vector<128x16xf32> to vector<128x16xbf16>
    %cst = arith.constant dense<0.000000e+00> : vector<128x32xf32>
    %4 = tpu.matmul %3, %0, %cst {dimension_numbers = #tpu.dot_dimension_numbers<[1], [0], [0], [1], [0, 0, 1, 1], [], []>} : vector<128x16xbf16>, vector<16x32xbf16>, vector<128x32xf32> -> vector<128x32xf32>
    %c0_5 = arith.constant 0 : index
    %c0_6 = arith.constant 0 : index
    %c0_7 = arith.constant 0 : index
    %c0_8 = arith.constant 0 : index
    %5 = vector.load %arg2[%c0_5, %c0_6, %c0_7, %c0_8] : memref<1x1x16x16xf32, #tpu.memory_space<vmem>>, vector<1x1x16x16xf32>
    %c0_9 = arith.constant 0 : index
    %c0_10 = arith.constant 0 : index
    %c0_11 = arith.constant 0 : index
    %c0_12 = arith.constant 0 : index
    %6 = vector.load %arg4[%c0_9, %c0_10, %c0_11, %c0_12] : memref<1x1x16x16xf32, #tpu.memory_space<vmem>>, vector<1x1x16x16xf32>
    %7 = tpu.concatenate %5, %6 in 1 : vector<1x1x16x16xf32>, vector<1x1x16x16xf32> -> vector<1x2x16x16xf32>
    %8 = vector.shape_cast %7 : vector<1x2x16x16xf32> to vector<32x16xf32>
    %9 = arith.truncf %8 : vector<32x16xf32> to vector<32x16xbf16>
    %cst_13 = arith.constant dense<0.000000e+00> : vector<32x32xf32>
    %10 = tpu.matmul %9, %0, %cst_13 {dimension_numbers = #tpu.dot_dimension_numbers<[1], [0], [0], [1], [0, 0, 1, 1], [], []>} : vector<32x16xbf16>, vector<16x32xbf16>, vector<32x32xf32> -> vector<32x32xf32>
    %11 = vector.shape_cast %4 : vector<128x32xf32> to vector<8x16x32xf32>
    %c1 = arith.constant 1 : index
    %c0_14 = arith.constant 0 : index
    %c0_15 = arith.constant 0 : index
    %12 = vector.load %arg9[%c1, %c0_14, %c0_15] : memref<10x16x32xf32, #tpu.memory_space<vmem>>, vector<8x16x32xf32>
    tpu.vector_store %arg9[%c1, %c0_14, %c0_15], %11 {strides = array<i32>} : memref<10x16x32xf32, #tpu.memory_space<vmem>>, vector<8x16x32xf32>,
    %c0_i32 = arith.constant 0 : i32
    %13 = arith.cmpi sgt, %arg1, %c0_i32 : i32
    %14 = arith.extui %13 : i1 to i32
    %15 = arith.sitofp %14 : i32 to f32
    %c1_i32 = arith.constant 1 : i32
    %16 = arith.cmpi slt, %arg1, %c1_i32 : i32
    %17 = arith.extui %16 : i1 to i32
    %18 = arith.sitofp %17 : i32 to f32
    %19 = vector.extract_strided_slice %10 {offsets = [0, 0], sizes = [16, 32], strides = [1, 1]} : vector<32x32xf32> to vector<16x32xf32>
    %20 = vector.shape_cast %19 : vector<16x32xf32> to vector<1x16x32xf32>
    %21 = vector.broadcast %15 : f32 to vector<1x16x32xf32>
    %22 = arith.mulf %20, %21 : vector<1x16x32xf32>
    %c0_16 = arith.constant 0 : index
    %c0_17 = arith.constant 0 : index
    %c0_18 = arith.constant 0 : index
    %23 = vector.load %arg9[%c0_16, %c0_17, %c0_18] : memref<10x16x32xf32, #tpu.memory_space<vmem>>, vector<1x16x32xf32>
    tpu.vector_store %arg9[%c0_16, %c0_17, %c0_18], %22 {strides = array<i32>} : memref<10x16x32xf32, #tpu.memory_space<vmem>>, vector<1x16x32xf32>,
    %24 = vector.extract_strided_slice %10 {offsets = [16, 0], sizes = [16, 32], strides = [1, 1]} : vector<32x32xf32> to vector<16x32xf32>
    %25 = vector.shape_cast %24 : vector<16x32xf32> to vector<1x16x32xf32>
    %26 = vector.broadcast %18 : f32 to vector<1x16x32xf32>
    %27 = arith.mulf %25, %26 : vector<1x16x32xf32>
    %c9 = arith.constant 9 : index
    %c0_19 = arith.constant 0 : index
    %c0_20 = arith.constant 0 : index
    %28 = vector.load %arg9[%c9, %c0_19, %c0_20] : memref<10x16x32xf32, #tpu.memory_space<vmem>>, vector<1x16x32xf32>
    tpu.vector_store %arg9[%c9, %c0_19, %c0_20], %27 {strides = array<i32>} : memref<10x16x32xf32, #tpu.memory_space<vmem>>, vector<1x16x32xf32>,
    %c0_21 = arith.constant 0 : index
    %c0_22 = arith.constant 0 : index
    %29 = vector.load %arg6[%c0_21, %c0_22] : memref<9x32xf32, #tpu.memory_space<vmem>>, vector<9x32xf32>
    %c0_23 = arith.constant 0 : index
    %c0_24 = arith.constant 0 : index
    %30 = vector.load %arg7[%c0_23, %c0_24] : memref<1x32xf32, #tpu.memory_space<vmem>>, vector<1x32xf32>
    %31 = vector.shape_cast %30 : vector<1x32xf32> to vector<1x1x32xf32>
    %c0_25 = arith.constant 0 : index
    %c0_26 = arith.constant 0 : index
    %c0_27 = arith.constant 0 : index
    %32 = vector.load %arg9[%c0_25, %c0_26, %c0_27] : memref<10x16x32xf32, #tpu.memory_space<vmem>>, vector<8x16x32xf32>
    %c1_28 = arith.constant 1 : index
    %c0_29 = arith.constant 0 : index
    %c0_30 = arith.constant 0 : index
    %33 = vector.load %arg9[%c1_28, %c0_29, %c0_30] : memref<10x16x32xf32, #tpu.memory_space<vmem>>, vector<8x16x32xf32>
    %c2 = arith.constant 2 : index
    %c0_31 = arith.constant 0 : index
    %c0_32 = arith.constant 0 : index
    %34 = vector.load %arg9[%c2, %c0_31, %c0_32] : memref<10x16x32xf32, #tpu.memory_space<vmem>>, vector<8x16x32xf32>
    %35 = vector.extract_strided_slice %29 {offsets = [1, 0], sizes = [1, 32], strides = [1, 1]} : vector<9x32xf32> to vector<1x32xf32>
    %36 = vector.shape_cast %35 : vector<1x32xf32> to vector<32xf32>
    %37 = vector.shape_cast %36 : vector<32xf32> to vector<1x1x32xf32>
    %38 = vector.broadcast %37 : vector<1x1x32xf32> to vector<8x16x32xf32>
    %39 = arith.mulf %32, %38 : vector<8x16x32xf32>
    %40 = vector.extract_strided_slice %29 {offsets = [4, 0], sizes = [1, 32], strides = [1, 1]} : vector<9x32xf32> to vector<1x32xf32>
    %41 = vector.shape_cast %40 : vector<1x32xf32> to vector<32xf32>
    %42 = vector.shape_cast %41 : vector<32xf32> to vector<1x1x32xf32>
    %43 = vector.broadcast %42 : vector<1x1x32xf32> to vector<8x16x32xf32>
    %44 = arith.mulf %33, %43 : vector<8x16x32xf32>
    %45 = arith.addf %39, %44 : vector<8x16x32xf32>
    %46 = vector.extract_strided_slice %29 {offsets = [7, 0], sizes = [1, 32], strides = [1, 1]} : vector<9x32xf32> to vector<1x32xf32>
    %47 = vector.shape_cast %46 : vector<1x32xf32> to vector<32xf32>
    %48 = vector.shape_cast %47 : vector<32xf32> to vector<1x1x32xf32>
    %49 = vector.broadcast %48 : vector<1x1x32xf32> to vector<8x16x32xf32>
    %50 = arith.mulf %34, %49 : vector<8x16x32xf32>
    %51 = arith.addf %45, %50 : vector<8x16x32xf32>
    %52 = vector.broadcast %31 : vector<1x1x32xf32> to vector<8x16x32xf32>
    %53 = arith.addf %51, %52 : vector<8x16x32xf32>
    %54 = tpu.iota {dimensions = array<i32: 1>} : vector<8x16x32xi32>
    %55 = vector.extract_strided_slice %29 {offsets = [0, 0], sizes = [1, 32], strides = [1, 1]} : vector<9x32xf32> to vector<1x32xf32>
    %56 = vector.shape_cast %55 : vector<1x32xf32> to vector<32xf32>
    %57 = vector.shape_cast %56 : vector<32xf32> to vector<1x1x32xf32>
    %58 = vector.broadcast %57 : vector<1x1x32xf32> to vector<8x16x32xf32>
    %59 = arith.mulf %32, %58 : vector<8x16x32xf32>
    %60 = vector.extract_strided_slice %29 {offsets = [3, 0], sizes = [1, 32], strides = [1, 1]} : vector<9x32xf32> to vector<1x32xf32>
    %61 = vector.shape_cast %60 : vector<1x32xf32> to vector<32xf32>
    %62 = vector.shape_cast %61 : vector<32xf32> to vector<1x1x32xf32>
    %63 = vector.broadcast %62 : vector<1x1x32xf32> to vector<8x16x32xf32>
    %64 = arith.mulf %33, %63 : vector<8x16x32xf32>
    %65 = arith.addf %59, %64 : vector<8x16x32xf32>
    %66 = vector.extract_strided_slice %29 {offsets = [6, 0], sizes = [1, 32], strides = [1, 1]} : vector<9x32xf32> to vector<1x32xf32>
    %67 = vector.shape_cast %66 : vector<1x32xf32> to vector<32xf32>
    %68 = vector.shape_cast %67 : vector<32xf32> to vector<1x1x32xf32>
    %69 = vector.broadcast %68 : vector<1x1x32xf32> to vector<8x16x32xf32>
    %70 = arith.mulf %34, %69 : vector<8x16x32xf32>
    %71 = arith.addf %65, %70 : vector<8x16x32xf32>
    %c1_i32_33 = arith.constant 1 : i32
    %72 = tpu.dynamic_rotate %71 by %c1_i32_33 dim 1 : vector<8x16x32xf32>, i32 -> vector<8x16x32xf32>
    %c0_i32_34 = arith.constant 0 : i32
    %73 = vector.broadcast %c0_i32_34 : i32 to vector<8x16x32xi32>
    %74 = arith.cmpi eq, %54, %73 : vector<8x16x32xi32>
    %cst_35 = arith.constant 0.000000e+00 : f32
    %75 = vector.broadcast %cst_35 : f32 to vector<8x16x32xf32>
    %76 = arith.select %74, %75, %72 : vector<8x16x32xi1>, vector<8x16x32xf32>
    %77 = arith.addf %53, %76 : vector<8x16x32xf32>
    %78 = vector.extract_strided_slice %29 {offsets = [2, 0], sizes = [1, 32], strides = [1, 1]} : vector<9x32xf32> to vector<1x32xf32>
    %79 = vector.shape_cast %78 : vector<1x32xf32> to vector<32xf32>
    %80 = vector.shape_cast %79 : vector<32xf32> to vector<1x1x32xf32>
    %81 = vector.broadcast %80 : vector<1x1x32xf32> to vector<8x16x32xf32>
    %82 = arith.mulf %32, %81 : vector<8x16x32xf32>
    %83 = vector.extract_strided_slice %29 {offsets = [5, 0], sizes = [1, 32], strides = [1, 1]} : vector<9x32xf32> to vector<1x32xf32>
    %84 = vector.shape_cast %83 : vector<1x32xf32> to vector<32xf32>
    %85 = vector.shape_cast %84 : vector<32xf32> to vector<1x1x32xf32>
    %86 = vector.broadcast %85 : vector<1x1x32xf32> to vector<8x16x32xf32>
    %87 = arith.mulf %33, %86 : vector<8x16x32xf32>
    %88 = arith.addf %82, %87 : vector<8x16x32xf32>
    %89 = vector.extract_strided_slice %29 {offsets = [8, 0], sizes = [1, 32], strides = [1, 1]} : vector<9x32xf32> to vector<1x32xf32>
    %90 = vector.shape_cast %89 : vector<1x32xf32> to vector<32xf32>
    %91 = vector.shape_cast %90 : vector<32xf32> to vector<1x1x32xf32>
    %92 = vector.broadcast %91 : vector<1x1x32xf32> to vector<8x16x32xf32>
    %93 = arith.mulf %34, %92 : vector<8x16x32xf32>
    %94 = arith.addf %88, %93 : vector<8x16x32xf32>
    %c15_i32 = arith.constant 15 : i32
    %95 = tpu.dynamic_rotate %94 by %c15_i32 dim 1 : vector<8x16x32xf32>, i32 -> vector<8x16x32xf32>
    %c15_i32_36 = arith.constant 15 : i32
    %96 = vector.broadcast %c15_i32_36 : i32 to vector<8x16x32xi32>
    %97 = arith.cmpi eq, %54, %96 : vector<8x16x32xi32>
    %cst_37 = arith.constant 0.000000e+00 : f32
    %98 = vector.broadcast %cst_37 : f32 to vector<8x16x32xf32>
    %99 = arith.select %97, %98, %95 : vector<8x16x32xi1>, vector<8x16x32xf32>
    %100 = arith.addf %77, %99 : vector<8x16x32xf32>
    %cst_38 = arith.constant 0.000000e+00 : f32
    %101 = vector.broadcast %cst_38 : f32 to vector<8x16x32xf32>
    %102 = arith.maximumf %100, %101 : vector<8x16x32xf32>
    %103 = vector.shape_cast %102 : vector<8x16x32xf32> to vector<1x8x16x32xf32>
    %c0_39 = arith.constant 0 : index
    %c0_40 = arith.constant 0 : index
    %c0_41 = arith.constant 0 : index
    %c0_42 = arith.constant 0 : index
    %104 = vector.load %arg8[%c0_39, %c0_40, %c0_41, %c0_42] : memref<1x8x16x32xf32, #tpu.memory_space<vmem>>, vector<1x8x16x32xf32>
    tpu.vector_store %arg8[%c0_39, %c0_40, %c0_41, %c0_42], %103 {strides = array<i32>} : memref<1x8x16x32xf32, #tpu.memory_space<vmem>>, vector<1x8x16x32xf32>,
    return
  }
  func.func @transform_0(%arg0: i32, %arg1: i32) -> (i32, i32, i32, i32) {
    %c8_i32 = arith.constant 8 : i32
    %0 = arith.muli %arg1, %c8_i32 : i32
    %c1_i32 = arith.constant 1 : i32
    %1 = arith.subi %0, %c1_i32 : i32
    %c0_i32 = arith.constant 0 : i32
    %2 = arith.maxsi %1, %c0_i32 : i32
    %c0_i32_0 = arith.constant 0 : i32
    %c0_i32_1 = arith.constant 0 : i32
    %c0_i32_2 = arith.constant 0 : i32
    return %arg0, %2, %c0_i32_0, %c0_i32_1 : i32, i32, i32, i32
  }
  func.func @transform_1(%arg0: i32, %arg1: i32) -> (i32, i32, i32, i32) {
    %c0_i32 = arith.constant 0 : i32
    %c0_i32_0 = arith.constant 0 : i32
    %c0_i32_1 = arith.constant 0 : i32
    return %arg0, %arg1, %c0_i32, %c0_i32_0 : i32, i32, i32, i32
  }
  func.func @transform_2(%arg0: i32, %arg1: i32) -> (i32, i32, i32, i32) {
    %c1_i32 = arith.constant 1 : i32
    %0 = arith.addi %arg1, %c1_i32 : i32
    %c8_i32 = arith.constant 8 : i32
    %1 = arith.muli %0, %c8_i32 : i32
    %c15_i32 = arith.constant 15 : i32
    %2 = arith.minsi %1, %c15_i32 : i32
    %c0_i32 = arith.constant 0 : i32
    %c0_i32_0 = arith.constant 0 : i32
    %c0_i32_1 = arith.constant 0 : i32
    return %arg0, %2, %c0_i32, %c0_i32_0 : i32, i32, i32, i32
  }
  func.func @transform_3(%arg0: i32, %arg1: i32) -> (i32, i32) {
    %c0_i32 = arith.constant 0 : i32
    %c0_i32_0 = arith.constant 0 : i32
    %c0_i32_1 = arith.constant 0 : i32
    return %c0_i32, %c0_i32_0 : i32, i32
  }
  func.func @transform_4(%arg0: i32, %arg1: i32) -> (i32, i32) {
    %c0_i32 = arith.constant 0 : i32
    %c0_i32_0 = arith.constant 0 : i32
    %c0_i32_1 = arith.constant 0 : i32
    return %c0_i32, %c0_i32_0 : i32, i32
  }
  func.func @transform_5(%arg0: i32, %arg1: i32) -> (i32, i32) {
    %c0_i32 = arith.constant 0 : i32
    %c0_i32_0 = arith.constant 0 : i32
    %c0_i32_1 = arith.constant 0 : i32
    return %c0_i32, %c0_i32_0 : i32, i32
  }
  func.func @transform_6(%arg0: i32, %arg1: i32) -> (i32, i32, i32, i32) {
    %c0_i32 = arith.constant 0 : i32
    %c0_i32_0 = arith.constant 0 : i32
    %c0_i32_1 = arith.constant 0 : i32
    return %arg0, %arg1, %c0_i32, %c0_i32_0 : i32, i32, i32, i32
  }
}

</mosaic_0001>

<llo_original>
// kernel: tpu_custom_call.1
$region0: #{tpu_custom_call.1}
  #allocation0 [shape = 'u32[]', space=smem, size = 0x4, offset = 0x4, fixed_abs, tag = 'smem constant byte address 0x4 - core index']
  #allocation1 [shape = 'u32[144,128]{1,0:T(1,128)}', space=vmem, size = 0x12000, scoped, tag = 'internal scratch']
  #allocation2 [shape = 'f32[10,16,32]{2,1,0:T(8,128)}', space=vmem, size = 0x14000, scoped, tag = 'scratch operand']
  %s0 = inlined_call_operand.hbm [shape: f32[2,16,16,16], index: 0, kind: input, shape index: {}]
  %s1 = inlined_call_operand.hbm [shape: f32[2,16,16,16], index: 1, kind: input, shape index: {}]
  %s2 = inlined_call_operand.hbm [shape: f32[2,16,16,16], index: 2, kind: input, shape index: {}]
  %s3 = inlined_call_operand.vmem [shape: bf16[16,32], index: 3, kind: input, shape index: {}]
  %s4 = inlined_call_operand.hbm [shape: f32[9,32], index: 4, kind: input, shape index: {}]
  %s5 = inlined_call_operand.vmem [shape: f32[1,32], index: 5, kind: input, shape index: {}]
  %s6 = inlined_call_operand.hbm [shape: f32[2,16,16,32], index: 6, kind: output, shape index: {}]
  %s7 = sld [smem:[#allocation0]]
  $region73: #{tpu_custom_call.1} parent=0
    _
  %s9 = ssub.s32 1, %s7
  %s10 = scalar_select 0, %s9, %s7
  $region1: #{tpu_custom_call.1} parent=0
    #allocation3 [shape = 'u8[16384]{0}', space=vmem, size = 0x4000, scoped, tag = 'input window, operand 0']
    #allocation4 [shape = 's32[2]{0}', space=sflag, size = 0x8, scoped, tag = 'scoped memory for tpu_custom_call.1']
    #allocation5 [shape = 's32[2]{0}', space=sflag, size = 0x8, scoped, tag = 'scoped memory for tpu_custom_call.1']
    #allocation6 [shape = 'u8[131072]{0}', space=vmem, size = 0x20000, scoped, tag = 'input window, operand 1']
    #allocation7 [shape = 's32[2]{0}', space=sflag, size = 0x8, scoped, tag = 'scoped memory for tpu_custom_call.1']
    #allocation8 [shape = 'u8[16384]{0}', space=vmem, size = 0x4000, scoped, tag = 'input window, operand 2']
    #allocation9 [shape = 'u8[8192]{0}', space=vmem, size = 0x2000, scoped, tag = 'input window, operand 4, single buffered']
    #allocation10 [shape = 's32[1]{0}', space=sflag, size = 0x4, scoped, tag = 'scoped memory for tpu_custom_call.1']
    #allocation11 [shape = 'u8[131072]{0}', space=vmem, size = 0x20000, scoped, tag = 'output window, operand 0']
    %11 = vsyncpa [#allocation4], 0
    %s12 = scalar_lea.sflag [#allocation4], 1
    %13 = vsyncpa %s12, 0
    %14 = vsyncpa [#allocation7], 0
    %s15 = scalar_lea.sflag [#allocation7], 1
    %16 = vsyncpa %s15, 0
    %17 = vsyncpa [#allocation10], 0
    %18 = vsyncpa [#allocation5], 0
    %s19 = scalar_lea.sflag [#allocation5], 1
    %20 = vsyncpa %s19, 0
    loop: start=0, step=1, limit=6
    $region2: #{tpu_custom_call.1} parent=1 // loop_pre_header
      _
    $region3: #{tpu_custom_call.1} parent=1 // loop_header
      %s22 = sphi 0, %s26
      %p23 = scmp.ge.s32.totalorder %s22, 6
      %s29 = sphi 0, %s41
      %s30 = sphi 0, %s37
      %s31 = sphi 0, %s29
      %s32 = sphi 0, %s30
      %s33 = sphi 0, %s31
      %s34 = sphi 0, %s32
      %s54 = sphi 0, %s56
      %s57 = sphi 0, %s54
      %s58 = sphi 0, %s57
      %s74 = sphi 0, %s58
      %s82 = sphi 0, %s84
      %s85 = sphi 0, %s82
      %s86 = sphi 0, %s85
      %s102 = sphi 0, %s86
      %s118 = sphi 0, %s120
      %s121 = sphi 0, %s118
      %s122 = sphi 0, %s121
      %s138 = sphi 0, %s122
      %s142 = sphi 0, %s142
      %s144 = sphi 0, %s142
      %s145 = sphi 0, %s144
      %s159 = sphi 0, %s145
      %s163 = sphi 0, %s163
      %s165 = sphi 0, %s163
      %s166 = sphi 0, %s165
      %s180 = sphi 0, %s166
      %s184 = sphi 0, %s184
      %s186 = sphi 0, %s184
      %s187 = sphi 0, %s186
      %s201 = sphi 0, %s187
      %s209 = sphi 0, %s211
      %s212 = sphi 0, %s209
      %s213 = sphi 0, %s212
      %s229 = sphi 0, %s213
    $region4: #{tpu_custom_call.1} parent=1 // loop_header_branch
      %25 = sbr.rel (%p23) target = $region8
    $region5: #{tpu_custom_call.1} parent=1 // loop_body
      %s27 = ssub.s32 %s22, 1
      %s28 = ssub.s32 %s22, 2
      %s35 = sadd.s32 1, %s30
      %p36 = scmp.ge.s32.totalorder %s35, 2
      %s37 = scalar_select %p36, 0, %s35
      %s38 = sadd.s32 1, %s29
      %s39 = scalar_select %p36, %s38, %s29
      %p40 = scmp.ge.s32.totalorder %s39, 2
      %s41 = scalar_select %p40, 0, %s39
      %s42 = smul.u32 %s30, 8
      %s43 = ssub.s32 %s42, 1
      %p44 = scmp.gt.s32.totalorder %s43, 0
      %s45 = scalar_select %p44, %s43, 0
      %s46 = smul.u32 %s37, 8
      %s47 = ssub.s32 %s46, 1
      %p48 = scmp.gt.s32.totalorder %s47, 0
      %s49 = scalar_select %p48, %s47, 0
      %s50 = ssub.s32 %s29, %s41
      %s51 = ssub.s32 %s45, %s49
      %s52 = sor.u32 %s50, %s51
      %p53 = scmp.eq.s32.totalorder %s52, 0
      %s55 = sadd.s32 %s54, 1
      %s56 = scalar_select %p53, %s54, %s55
      %p59 = pneg %p53
      %p60 = scmp.eq.s32.totalorder %s22, 3
      %p61 = por %p59, %p60
      %p62 = scmp.ne.s32.totalorder %s54, %s57
      %p63 = scmp.eq.s32.totalorder %s22, 0
      %p64 = por %p62, %p63
      %p65 = scmp.ne.s32.totalorder %s54, %s57
      %p66 = scmp.eq.s32.totalorder %s27, 3
      %p67 = por %p65, %p66
      %p68 = scmp.ne.s32.totalorder %s57, %s58
      %p69 = scmp.eq.s32.totalorder %s27, 0
      %p70 = por %p68, %p69
      %p71 = scmp.ne.s32.totalorder %s57, %s58
      %p72 = scmp.eq.s32.totalorder %s28, 3
      %p73 = por %p71, %p72
      %p75 = scmp.ne.s32.totalorder %s58, %s74
      %p76 = scmp.eq.s32.totalorder %s28, 0
      %p77 = por %p75, %p76
      %s78 = ssub.s32 %s29, %s41
      %s79 = ssub.s32 %s30, %s37
      %s80 = sor.u32 %s78, %s79
      %p81 = scmp.eq.s32.totalorder %s80, 0
      %s83 = sadd.s32 %s82, 1
      %s84 = scalar_select %p81, %s82, %s83
      %p87 = pneg %p81
      %p88 = scmp.eq.s32.totalorder %s22, 3
      %p89 = por %p87, %p88
      %p90 = scmp.ne.s32.totalorder %s82, %s85
      %p91 = scmp.eq.s32.totalorder %s22, 0
      %p92 = por %p90, %p91
      %p93 = scmp.ne.s32.totalorder %s82, %s85
      %p94 = scmp.eq.s32.totalorder %s27, 3
      %p95 = por %p93, %p94
      %p96 = scmp.ne.s32.totalorder %s85, %s86
      %p97 = scmp.eq.s32.totalorder %s27, 0
      %p98 = por %p96, %p97
      %p99 = scmp.ne.s32.totalorder %s85, %s86
      %p100 = scmp.eq.s32.totalorder %s28, 3
      %p101 = por %p99, %p100
      %p103 = scmp.ne.s32.totalorder %s86, %s102
      %p104 = scmp.eq.s32.totalorder %s28, 0
      %p105 = por %p103, %p104
      %s106 = sadd.s32 %s30, 1
      %s107 = smul.u32 %s106, 8
      %p108 = scmp.lt.s32.totalorder %s107, 15
      %s109 = scalar_select %p108, %s107, 15
      %s110 = sadd.s32 %s37, 1
      %s111 = smul.u32 %s110, 8
      %p112 = scmp.lt.s32.totalorder %s111, 15
      %s113 = scalar_select %p112, %s111, 15
      %s114 = ssub.s32 %s29, %s41
      %s115 = ssub.s32 %s109, %s113
      %s116 = sor.u32 %s114, %s115
      %p117 = scmp.eq.s32.totalorder %s116, 0
      %s119 = sadd.s32 %s118, 1
      %s120 = scalar_select %p117, %s118, %s119
      %p123 = pneg %p117
      %p124 = scmp.eq.s32.totalorder %s22, 3
      %p125 = por %p123, %p124
      %p126 = scmp.ne.s32.totalorder %s118, %s121
      %p127 = scmp.eq.s32.totalorder %s22, 0
      %p128 = por %p126, %p127
      %p129 = scmp.ne.s32.totalorder %s118, %s121
      %p130 = scmp.eq.s32.totalorder %s27, 3
      %p131 = por %p129, %p130
      %p132 = scmp.ne.s32.totalorder %s121, %s122
      %p133 = scmp.eq.s32.totalorder %s27, 0
      %p134 = por %p132, %p133
      %p135 = scmp.ne.s32.totalorder %s121, %s122
      %p136 = scmp.eq.s32.totalorder %s28, 3
      %p137 = por %p135, %p136
      %p139 = scmp.ne.s32.totalorder %s122, %s138
      %p140 = scmp.eq.s32.totalorder %s28, 0
      %p141 = por %p139, %p140
      %s143 = sadd.s32 %s142, 1
      %p146 = scmp.eq.s32.totalorder %s22, 3
      %p147 = scmp.ne.s32.totalorder %s142, %s144
      %p148 = scmp.eq.s32.totalorder %s22, 0
      %p149 = por %p147, %p148
      %p150 = scmp.ne.s32.totalorder %s142, %s144
      %p151 = scmp.eq.s32.totalorder %s27, 3
      %p152 = por %p150, %p151
      %p153 = scmp.ne.s32.totalorder %s144, %s145
      %p154 = scmp.eq.s32.totalorder %s27, 0
      %p155 = por %p153, %p154
      %p156 = scmp.ne.s32.totalorder %s144, %s145
      %p157 = scmp.eq.s32.totalorder %s28, 3
      %p158 = por %p156, %p157
      %p160 = scmp.ne.s32.totalorder %s145, %s159
      %p161 = scmp.eq.s32.totalorder %s28, 0
      %p162 = por %p160, %p161
      %s164 = sadd.s32 %s163, 1
      %p167 = scmp.eq.s32.totalorder %s22, 3
      %p168 = scmp.ne.s32.totalorder %s163, %s165
      %p169 = scmp.eq.s32.totalorder %s22, 0
      %p170 = por %p168, %p169
      %p171 = scmp.ne.s32.totalorder %s163, %s165
      %p172 = scmp.eq.s32.totalorder %s27, 3
      %p173 = por %p171, %p172
      %p174 = scmp.ne.s32.totalorder %s165, %s166
      %p175 = scmp.eq.s32.totalorder %s27, 0
      %p176 = por %p174, %p175
      %p177 = scmp.ne.s32.totalorder %s165, %s166
      %p178 = scmp.eq.s32.totalorder %s28, 3
      %p179 = por %p177, %p178
      %p181 = scmp.ne.s32.totalorder %s166, %s180
      %p182 = scmp.eq.s32.totalorder %s28, 0
      %p183 = por %p181, %p182
      %s185 = sadd.s32 %s184, 1
      %p188 = scmp.eq.s32.totalorder %s22, 3
      %p189 = scmp.ne.s32.totalorder %s184, %s186
      %p190 = scmp.eq.s32.totalorder %s22, 0
      %p191 = por %p189, %p190
      %p192 = scmp.ne.s32.totalorder %s184, %s186
      %p193 = scmp.eq.s32.totalorder %s27, 3
      %p194 = por %p192, %p193
      %p195 = scmp.ne.s32.totalorder %s186, %s187
      %p196 = scmp.eq.s32.totalorder %s27, 0
      %p197 = por %p195, %p196
      %p198 = scmp.ne.s32.totalorder %s186, %s187
      %p199 = scmp.eq.s32.totalorder %s28, 3
      %p200 = por %p198, %p199
      %p202 = scmp.ne.s32.totalorder %s187, %s201
      %p203 = scmp.eq.s32.totalorder %s28, 0
      %p204 = por %p202, %p203
      %s205 = ssub.s32 %s29, %s41
      %s206 = ssub.s32 %s30, %s37
      %s207 = sor.u32 %s205, %s206
      %p208 = scmp.eq.s32.totalorder %s207, 0
      %s210 = sadd.s32 %s209, 1
      %s211 = scalar_select %p208, %s209, %s210
      %p214 = pneg %p208
      %p215 = scmp.eq.s32.totalorder %s22, 3
      %p216 = por %p214, %p215
      %p217 = scmp.ne.s32.totalorder %s209, %s212
      %p218 = scmp.eq.s32.totalorder %s22, 0
      %p219 = por %p217, %p218
      %p220 = scmp.ne.s32.totalorder %s209, %s212
      %p221 = scmp.eq.s32.totalorder %s27, 3
      %p222 = por %p220, %p221
      %p223 = scmp.ne.s32.totalorder %s212, %s213
      %p224 = scmp.eq.s32.totalorder %s27, 0
      %p225 = por %p223, %p224
      %p226 = scmp.ne.s32.totalorder %s212, %s213
      %p227 = scmp.eq.s32.totalorder %s28, 3
      %p228 = por %p226, %p227
      %p230 = scmp.ne.s32.totalorder %s213, %s229
      %p231 = scmp.eq.s32.totalorder %s28, 0
      %p232 = por %p230, %p231
      %p233 = scmp.le.s32.totalorder 1, %s22
      %p234 = scmp.lt.s32.totalorder %s22, 5
      %p235 = pnand %p233, %p234
      %p236 = pneg %p235
      // Predicated region
      $region9: #{tpu_custom_call.1} parent=5 // pred_check
        _
      $region10: #{tpu_custom_call.1} parent=5 // pred_check_branch
        %238 = sbr.rel (%p235) target = $region12
      $region11: #{tpu_custom_call.1} parent=5 // pred_region
        %s239 = ssub.s32 %s22, 1
        // Predicated region
        $region13: #{tpu_custom_call.1} parent=11 // pred_check
          %p240 = pneg %p155
        $region14: #{tpu_custom_call.1} parent=11 // pred_check_branch
          %242 = sbr.rel (%p240) target = $region16
        $region15: #{tpu_custom_call.1} parent=11 // pred_region
          _
        $region16: #{tpu_custom_call.1} parent=11 // pred_fallthru
          _
        // Predicated region
        $region17: #{tpu_custom_call.1} parent=11 // pred_check
          %p243 = pneg %p176
        $region18: #{tpu_custom_call.1} parent=11 // pred_check_branch
          %245 = sbr.rel (%p243) target = $region20
        $region19: #{tpu_custom_call.1} parent=11 // pred_region
          %s247 = ssub.s32 256, 256
          %248 = vsyncadd [#allocation10], %s247
          %s249 = sshll.u32 [#allocation9], 4
          %s250 = int_to_ptr.vmem [resolvable:$true] %s249
          %255 = dma.hbm_to_vmem [thread:$0]  %s4, 256, %s250, [#allocation10], 128, 128, 8
        $region20: #{tpu_custom_call.1} parent=11 // pred_fallthru
          _
        // Predicated region
        $region21: #{tpu_custom_call.1} parent=11 // pred_check
          %p256 = pneg %p197
        $region22: #{tpu_custom_call.1} parent=11 // pred_check_branch
          %258 = sbr.rel (%p256) target = $region24
        $region23: #{tpu_custom_call.1} parent=11 // pred_region
          _
        $region24: #{tpu_custom_call.1} parent=11 // pred_fallthru
          _
      $region12: #{tpu_custom_call.1} parent=5 // pred_fallthru
        _
      %p259 = scmp.lt.s32.totalorder %s22, 4
      // Predicated region
      $region25: #{tpu_custom_call.1} parent=5 // pred_check
        %p260 = pneg %p259
      $region26: #{tpu_custom_call.1} parent=5 // pred_check_branch
        %262 = sbr.rel (%p260) target = $region28
      $region27: #{tpu_custom_call.1} parent=5 // pred_region
        // Predicated region
        $region29: #{tpu_custom_call.1} parent=27 // pred_check
          %p263 = pneg %p64
        $region30: #{tpu_custom_call.1} parent=27 // pred_check_branch
          %265 = sbr.rel (%p263) target = $region32
        $region31: #{tpu_custom_call.1} parent=27 // pred_region
          %s266 = sand.u32 %s54, 1
          %s267 = scalar_lea.sflag [#allocation4], %s266
          %s268 = sand.u32 %s54, 1
          %s269 = smul.addr %s268, 16
          %s270 = scalar_lea.vmem [#allocation3], %s269
          %s271 = smul.u32 %s30, 8
          %s272 = ssub.s32 %s271, 1
          %p273 = scmp.gt.s32.totalorder %s272, 0
          %s274 = scalar_select %p273, %s272, 0
          %s276 = ssub.s32 256, 256
          %277 = vsyncadd %s267, %s276
          %s278 = smul.addr %s274, 2
          %s279 = smul.addr %s29, 32
          %s280 = sadd.s32 %s278, %s279
          %s281 = smul.addr %s280, 128
          %s282 = scalar_lea.hbm %s0, %s281
          %s283 = sshll.u32 %s270, 4
          %s284 = int_to_ptr.vmem [resolvable:$true] %s283
          %289 = dma.hbm_to_vmem [thread:$0]  %s282, 256, %s284, %s267, 128, 128, 8
        $region32: #{tpu_custom_call.1} parent=27 // pred_fallthru
          _
        // Predicated region
        $region33: #{tpu_custom_call.1} parent=27 // pred_check
          %p290 = pneg %p92
        $region34: #{tpu_custom_call.1} parent=27 // pred_check_branch
          %292 = sbr.rel (%p290) target = $region36
        $region35: #{tpu_custom_call.1} parent=27 // pred_region
          %s293 = sand.u32 %s22, 1
          %s294 = scalar_lea.sflag [#allocation7], %s293
          %s295 = sand.u32 %s82, 1
          %s296 = smul.addr %s295, 128
          %s297 = scalar_lea.vmem [#allocation6], %s296
          %s298 = smul.u32 8, %s30
          %s300 = ssub.s32 2048, 2048
          %301 = vsyncadd %s294, %s300
          %s302 = smul.addr %s298, 2
          %s303 = smul.addr %s29, 32
          %s304 = sadd.s32 %s302, %s303
          %s305 = smul.addr %s304, 128
          %s306 = scalar_lea.hbm %s1, %s305
          %s307 = sshll.u32 %s297, 4
          %s308 = int_to_ptr.vmem [resolvable:$true] %s307
          %313 = dma.hbm_to_vmem [thread:$0]  %s306, 2048, %s308, %s294, 128, 128, 8
        $region36: #{tpu_custom_call.1} parent=27 // pred_fallthru
          _
        // Predicated region
        $region37: #{tpu_custom_call.1} parent=27 // pred_check
          %p314 = pneg %p128
        $region38: #{tpu_custom_call.1} parent=27 // pred_check_branch
          %316 = sbr.rel (%p314) target = $region40
        $region39: #{tpu_custom_call.1} parent=27 // pred_region
          %s317 = sand.u32 %s22, 1
          %s318 = scalar_lea.sflag [#allocation7], %s317
          %s319 = sand.u32 %s118, 1
          %s320 = smul.addr %s319, 16
          %s321 = scalar_lea.vmem [#allocation8], %s320
          %s322 = sadd.s32 %s30, 1
          %s323 = smul.u32 %s322, 8
          %p324 = scmp.lt.s32.totalorder %s323, 15
          %s325 = scalar_select %p324, %s323, 15
          %s327 = ssub.s32 256, 256
          %328 = vsyncadd %s318, %s327
          %s329 = smul.addr %s325, 2
          %s330 = smul.addr %s29, 32
          %s331 = sadd.s32 %s329, %s330
          %s332 = smul.addr %s331, 128
          %s333 = scalar_lea.hbm %s2, %s332
          %s334 = sshll.u32 %s321, 4
          %s335 = int_to_ptr.vmem [resolvable:$true] %s334
          %340 = dma.hbm_to_vmem [thread:$0]  %s333, 256, %s335, %s318, 128, 128, 8
        $region40: #{tpu_custom_call.1} parent=27 // pred_fallthru
          _
      $region28: #{tpu_custom_call.1} parent=5 // pred_fallthru
        _
      %p341 = scmp.le.s32.totalorder 1, %s22
      %p342 = scmp.lt.s32.totalorder %s22, 5
      %p343 = pnand %p341, %p342
      %p344 = pneg %p343
      // Predicated region
      $region41: #{tpu_custom_call.1} parent=5 // pred_check
        _
      $region42: #{tpu_custom_call.1} parent=5 // pred_check_branch
        %346 = sbr.rel (%p343) target = $region44
      $region43: #{tpu_custom_call.1} parent=5 // pred_region
        %s347 = ssub.s32 %s22, 1
        %s348 = sand.u32 %s57, 1
        %s349 = scalar_lea.sflag [#allocation4], %s348
        %s350 = sand.u32 %s57, 1
        %s351 = smul.addr %s350, 16
        %s352 = scalar_lea.vmem [#allocation3], %s351
        // Predicated region
        $region45: #{tpu_custom_call.1} parent=43 // pred_check
          %p353 = pneg %p70
        $region46: #{tpu_custom_call.1} parent=43 // pred_check_branch
          %355 = sbr.rel (%p353) target = $region48
        $region47: #{tpu_custom_call.1} parent=43 // pred_region
          %356 = dma.done %s349, 256
        $region48: #{tpu_custom_call.1} parent=43 // pred_fallthru
          _
        %s357 = sand.u32 %s27, 1
        %s358 = scalar_lea.sflag [#allocation7], %s357
        %s359 = sand.u32 %s85, 1
        %s360 = smul.addr %s359, 128
        %s361 = scalar_lea.vmem [#allocation6], %s360
        // Predicated region
        $region49: #{tpu_custom_call.1} parent=43 // pred_check
          %p362 = pneg %p98
        $region50: #{tpu_custom_call.1} parent=43 // pred_check_branch
          %364 = sbr.rel (%p362) target = $region52
        $region51: #{tpu_custom_call.1} parent=43 // pred_region
          %365 = dma.done %s358, 2048
        $region52: #{tpu_custom_call.1} parent=43 // pred_fallthru
          _
        %s366 = sand.u32 %s27, 1
        %s367 = scalar_lea.sflag [#allocation7], %s366
        %s368 = sand.u32 %s121, 1
        %s369 = smul.addr %s368, 16
        %s370 = scalar_lea.vmem [#allocation8], %s369
        // Predicated region
        $region53: #{tpu_custom_call.1} parent=43 // pred_check
          %p371 = pneg %p134
        $region54: #{tpu_custom_call.1} parent=43 // pred_check_branch
          %373 = sbr.rel (%p371) target = $region56
        $region55: #{tpu_custom_call.1} parent=43 // pred_region
          %374 = dma.done %s367, 256
        $region56: #{tpu_custom_call.1} parent=43 // pred_fallthru
          _
        // Predicated region
        $region57: #{tpu_custom_call.1} parent=43 // pred_check
          %p375 = pneg %p176
        $region58: #{tpu_custom_call.1} parent=43 // pred_check_branch
          %377 = sbr.rel (%p375) target = $region60
        $region59: #{tpu_custom_call.1} parent=43 // pred_region
          %378 = dma.done [#allocation10], 256
        $region60: #{tpu_custom_call.1} parent=43 // pred_fallthru
          _
        %s379 = sand.u32 %s57, 1
        %s380 = scalar_lea.sflag [#allocation4], %s379
        %s381 = sand.u32 %s57, 1
        %s382 = smul.addr %s381, 16
        %s383 = scalar_lea.vmem [#allocation3], %s382
        %p384 = pneg %p70
        %p385 = pneg %p67
        %s386 = sand.u32 %s27, 1
        %s387 = scalar_lea.sflag [#allocation7], %s386
        %s388 = sand.u32 %s85, 1
        %s389 = smul.addr %s388, 128
        %s390 = scalar_lea.vmem [#allocation6], %s389
        %p391 = pneg %p98
        %p392 = pneg %p95
        %s393 = sand.u32 %s27, 1
        %s394 = scalar_lea.sflag [#allocation7], %s393
        %s395 = sand.u32 %s121, 1
        %s396 = smul.addr %s395, 16
        %s397 = scalar_lea.vmem [#allocation8], %s396
        %p398 = pneg %p134
        %p399 = pneg %p131
        %p400 = pneg %p155
        %p401 = pneg %p152
        %p402 = pneg %p176
        %p403 = pneg %p173
        %p404 = pneg %p197
        %p405 = pneg %p194
        %p406 = pneg %p225
        %p407 = pneg %p222
        %s408 = sand.u32 %s212, 1
        %s409 = scalar_lea.sflag [#allocation5], %s408
        %s410 = sand.u32 %s212, 1
        %s411 = smul.addr %s410, 128
        %s412 = scalar_lea.vmem [#allocation11], %s411
        %s413 = smul.u32 %s32, 8
        %s414 = ssub.s32 %s413, 1
        %p415 = scmp.gt.s32.totalorder %s414, 0
        %s416 = scalar_select %p415, %s414, 0
        %s417 = smul.u32 8, %s32
        %s418 = sadd.s32 %s32, 1
        %s419 = smul.u32 %s418, 8
        %p420 = scmp.lt.s32.totalorder %s419, 15
        %s421 = scalar_select %p420, %s419, 15
        %s422 = smul.u32 8, %s32
        %v424 = vld [vmem:[%s3] sm:$0xf]
        %v425 = vld [vmem:[%s3 + $0x4] sm:$0xf]
        %v426 = vld [vmem:[%s361] sm:$0xff]
        %v427 = vld [vmem:[%s361 + $0x8] sm:$0xff]
        %v428 = vld [vmem:[%s361 + $0x10] sm:$0xff]
        %v429 = vld [vmem:[%s361 + $0x18] sm:$0xff]
        %v430 = vld [vmem:[%s361 + $0x20] sm:$0xff]
        %v431 = vld [vmem:[%s361 + $0x28] sm:$0xff]
        %v432 = vld [vmem:[%s361 + $0x30] sm:$0xff]
        %v433 = vld [vmem:[%s361 + $0x38] sm:$0xff]
        %v434 = vld [vmem:[%s361 + $0x40] sm:$0xff]
        %v435 = vld [vmem:[%s361 + $0x48] sm:$0xff]
        %v436 = vld [vmem:[%s361 + $0x50] sm:$0xff]
        %v437 = vld [vmem:[%s361 + $0x58] sm:$0xff]
        %v438 = vld [vmem:[%s361 + $0x60] sm:$0xff]
        %v439 = vld [vmem:[%s361 + $0x68] sm:$0xff]
        %v440 = vld [vmem:[%s361 + $0x70] sm:$0xff]
        %v441 = vld [vmem:[%s361 + $0x78] sm:$0xff]
        %v442 = vpack.c.bf16 %v427, %v426
        %v443 = vpack.c.bf16 %v429, %v428
        %v444 = vpack.c.bf16 %v431, %v430
        %v445 = vpack.c.bf16 %v433, %v432
        %v446 = vpack.c.bf16 %v435, %v434
        %v447 = vpack.c.bf16 %v437, %v436
        %v448 = vpack.c.bf16 %v439, %v438
        %v449 = vpack.c.bf16 %v441, %v440
        %v452 = vunpack.c.l.b16 %v424
        %v453 = vunpack.c.l.b16 %v425
        %v454 = vpack.c.b16 %v453, %v452
        %vm456 = vcmask 130048
        %v458 = vsel %vm456, %v442, 0
        %v461 = vsel %vm456, %v443, 0
        %v464 = vsel %vm456, %v444, 0
        %v467 = vsel %vm456, %v445, 0
        %v470 = vsel %vm456, %v446, 0
        %v473 = vsel %vm456, %v447, 0
        %v476 = vsel %vm456, %v448, 0
        %v479 = vsel %vm456, %v449, 0
        %481 = vmatprep.subr.bf16.mxu0 0
        %482 = vmatpush1.bf16.msra.mxu0 %v454
        %483 = vmatprep.subr.bf16.mxu0 0
        %484 = vmatpush1.bf16.msra.mxu0 0
        %485 = vmatprep.subr.bf16.mxu0 0
        %486 = vmatpush1.bf16.msra.mxu0 0
        %487 = vmatprep.subr.bf16.mxu0 0
        %488 = vmatpush1.bf16.msra.mxu0 0
        %489 = vmatprep.subr.bf16.mxu0 0
        %490 = vmatpush1.bf16.msra.mxu0 0
        %491 = vmatprep.subr.bf16.mxu0 0
        %492 = vmatpush1.bf16.msra.mxu0 0
        %493 = vmatprep.subr.bf16.mxu0 0
        %494 = vmatpush1.bf16.msra.mxu0 0
        %495 = vmatprep.subr.bf16.mxu0 0
        %496 = vmatpush1.bf16.msra.mxu0 0
        %497 = vmatprep.subr.bf16.mxu0 0
        %498 = vmatpush1.bf16.msra.mxu0 0
        %499 = vmatprep.subr.bf16.mxu0 0
        %500 = vmatpush1.bf16.msra.mxu0 0
        %501 = vmatprep.subr.bf16.mxu0 0
        %502 = vmatpush1.bf16.msra.mxu0 0
        %503 = vmatprep.subr.bf16.mxu0 0
        %504 = vmatpush1.bf16.msra.mxu0 0
        %505 = vmatprep.subr.bf16.mxu0 0
        %506 = vmatpush1.bf16.msra.mxu0 0
        %507 = vmatprep.subr.bf16.mxu0 0
        %508 = vmatpush1.bf16.msra.mxu0 0
        %509 = vmatprep.subr.bf16.mxu0 0
        %510 = vmatpush1.bf16.msra.mxu0 0
        %511 = vmatprep.subr.bf16.mxu0 0
        %512 = vmatpush1.bf16.msra.mxu0 0
        %513 = vmatprep.mubr.bf16.mxu0 0
        %514 = vmatmul.mubr.bf16.gmra.mrb[0].mxu0 %v458
        %v515 = vpop.f32.mrb[0].mxu0
        %v516 = vadd.f32 0.0, %v515
        %v517 = vpop.f32.mrb[0].mxu0
        %v518 = vpop.f32.mrb[0].mxu0
        %v519 = vadd.f32 0.0, %v518
        %v520 = vpop.f32.mrb[0].mxu0
        %521 = vmatprep.mubr.bf16.mxu0 0
        %522 = vmatmul.mubr.bf16.gmra.mrb[0].mxu0 %v461
        %v523 = vpop.f32.mrb[0].mxu0
        %v524 = vadd.f32 0.0, %v523
        %v525 = vpop.f32.mrb[0].mxu0
        %v526 = vpop.f32.mrb[0].mxu0
        %v527 = vadd.f32 0.0, %v526
        %v528 = vpop.f32.mrb[0].mxu0
        %529 = vmatprep.mubr.bf16.mxu0 0
        %530 = vmatmul.mubr.bf16.gmra.mrb[0].mxu0 %v464
        %v531 = vpop.f32.mrb[0].mxu0
        %v532 = vadd.f32 0.0, %v531
        %v533 = vpop.f32.mrb[0].mxu0
        %v534 = vpop.f32.mrb[0].mxu0
        %v535 = vadd.f32 0.0, %v534
        %v536 = vpop.f32.mrb[0].mxu0
        %537 = vmatprep.mubr.bf16.mxu0 0
        %538 = vmatmul.mubr.bf16.gmra.mrb[0].mxu0 %v467
        %v539 = vpop.f32.mrb[0].mxu0
        %v540 = vadd.f32 0.0, %v539
        %v541 = vpop.f32.mrb[0].mxu0
        %v542 = vpop.f32.mrb[0].mxu0
        %v543 = vadd.f32 0.0, %v542
        %v544 = vpop.f32.mrb[0].mxu0
        %545 = vmatprep.mubr.bf16.mxu0 0
        %546 = vmatmul.mubr.bf16.gmra.mrb[0].mxu0 %v470
        %v547 = vpop.f32.mrb[0].mxu0
        %v548 = vadd.f32 0.0, %v547
        %v549 = vpop.f32.mrb[0].mxu0
        %v550 = vpop.f32.mrb[0].mxu0
        %v551 = vadd.f32 0.0, %v550
        %v552 = vpop.f32.mrb[0].mxu0
        %553 = vmatprep.mubr.bf16.mxu0 0
        %554 = vmatmul.mubr.bf16.gmra.mrb[0].mxu0 %v473
        %v555 = vpop.f32.mrb[0].mxu0
        %v556 = vadd.f32 0.0, %v555
        %v557 = vpop.f32.mrb[0].mxu0
        %v558 = vpop.f32.mrb[0].mxu0
        %v559 = vadd.f32 0.0, %v558
        %v560 = vpop.f32.mrb[0].mxu0
        %561 = vmatprep.mubr.bf16.mxu0 0
        %562 = vmatmul.mubr.bf16.gmra.mrb[0].mxu0 %v476
        %v563 = vpop.f32.mrb[0].mxu0
        %v564 = vadd.f32 0.0, %v563
        %v565 = vpop.f32.mrb[0].mxu0
        %v566 = vpop.f32.mrb[0].mxu0
        %v567 = vadd.f32 0.0, %v566
        %v568 = vpop.f32.mrb[0].mxu0
        %569 = vmatprep.mubr.bf16.mxu0 0
        %570 = vmatmul.mubr.bf16.gmra.mrb[0].mxu0 %v479
        %v571 = vpop.f32.mrb[0].mxu0
        %v572 = vadd.f32 0.0, %v571
        %v573 = vpop.f32.mrb[0].mxu0
        %v574 = vpop.f32.mrb[0].mxu0
        %v575 = vadd.f32 0.0, %v574
        %v576 = vpop.f32.mrb[0].mxu0
        %577 = vdwg.mxu0
        %v578 = vld [vmem:[%s352] sm:$0xff]
        %v579 = vld [vmem:[%s352 + $0x8] sm:$0xff]
        %v580 = vld [vmem:[%s370] sm:$0xff]
        %v581 = vld [vmem:[%s370 + $0x8] sm:$0xff]
        %v582 = vpack.c.bf16 %v579, %v578
        %v583 = vpack.c.bf16 %v581, %v580
        %v585 = vsel %vm456, %v582, 0
        %v588 = vsel %vm456, %v583, 0
        %590 = vmatprep.subr.bf16.mxu0 0
        %591 = vmatpush1.bf16.msra.mxu0 %v454
        %592 = vmatprep.subr.bf16.mxu0 0
        %593 = vmatpush1.bf16.msra.mxu0 0
        %594 = vmatprep.subr.bf16.mxu0 0
        %595 = vmatpush1.bf16.msra.mxu0 0
        %596 = vmatprep.subr.bf16.mxu0 0
        %597 = vmatpush1.bf16.msra.mxu0 0
        %598 = vmatprep.subr.bf16.mxu0 0
        %599 = vmatpush1.bf16.msra.mxu0 0
        %600 = vmatprep.subr.bf16.mxu0 0
        %601 = vmatpush1.bf16.msra.mxu0 0
        %602 = vmatprep.subr.bf16.mxu0 0
        %603 = vmatpush1.bf16.msra.mxu0 0
        %604 = vmatprep.subr.bf16.mxu0 0
        %605 = vmatpush1.bf16.msra.mxu0 0
        %606 = vmatprep.subr.bf16.mxu0 0
        %607 = vmatpush1.bf16.msra.mxu0 0
        %608 = vmatprep.subr.bf16.mxu0 0
        %609 = vmatpush1.bf16.msra.mxu0 0
        %610 = vmatprep.subr.bf16.mxu0 0
        %611 = vmatpush1.bf16.msra.mxu0 0
        %612 = vmatprep.subr.bf16.mxu0 0
        %613 = vmatpush1.bf16.msra.mxu0 0
        %614 = vmatprep.subr.bf16.mxu0 0
        %615 = vmatpush1.bf16.msra.mxu0 0
        %616 = vmatprep.subr.bf16.mxu0 0
        %617 = vmatpush1.bf16.msra.mxu0 0
        %618 = vmatprep.subr.bf16.mxu0 0
        %619 = vmatpush1.bf16.msra.mxu0 0
        %620 = vmatprep.subr.bf16.mxu0 0
        %621 = vmatpush1.bf16.msra.mxu0 0
        %622 = vmatprep.mubr.bf16.mxu0 0
        %623 = vmatmul.mubr.bf16.gmra.mrb[0].mxu0 %v585
        %v624 = vpop.f32.mrb[0].mxu0
        %v625 = vadd.f32 0.0, %v624
        %v626 = vpop.f32.mrb[0].mxu0
        %v627 = vpop.f32.mrb[0].mxu0
        %v628 = vadd.f32 0.0, %v627
        %v629 = vpop.f32.mrb[0].mxu0
        %630 = vmatprep.mubr.bf16.mxu0 0
        %631 = vmatmul.mubr.bf16.gmra.mrb[0].mxu0 %v588
        %v632 = vpop.f32.mrb[0].mxu0
        %v633 = vadd.f32 0.0, %v632
        %v634 = vpop.f32.mrb[0].mxu0
        %v635 = vpop.f32.mrb[0].mxu0
        %v636 = vadd.f32 0.0, %v635
        %v637 = vpop.f32.mrb[0].mxu0
        %638 = vdwg.mxu0
        %s639 = scalar_lea.vmem [#allocation2], 16
        %vm640 = vcmask 261120
        %641 = vst.msk [vmem:[%s639] sm:$0xff] %vm640, %v516
        %642 = vst.msk [vmem:[%s639 + $0x8] sm:$0xff] %vm640, %v519
        %643 = vst.msk [vmem:[%s639 + $0x10] sm:$0xff] %vm640, %v524
        %644 = vst.msk [vmem:[%s639 + $0x18] sm:$0xff] %vm640, %v527
        %645 = vst.msk [vmem:[%s639 + $0x20] sm:$0xff] %vm640, %v532
        %646 = vst.msk [vmem:[%s639 + $0x28] sm:$0xff] %vm640, %v535
        %647 = vst.msk [vmem:[%s639 + $0x30] sm:$0xff] %vm640, %v540
        %648 = vst.msk [vmem:[%s639 + $0x38] sm:$0xff] %vm640, %v543
        %649 = vst.msk [vmem:[%s639 + $0x40] sm:$0xff] %vm640, %v548
        %650 = vst.msk [vmem:[%s639 + $0x48] sm:$0xff] %vm640, %v551
        %651 = vst.msk [vmem:[%s639 + $0x50] sm:$0xff] %vm640, %v556
        %652 = vst.msk [vmem:[%s639 + $0x58] sm:$0xff] %vm640, %v559
        %653 = vst.msk [vmem:[%s639 + $0x60] sm:$0xff] %vm640, %v564
        %654 = vst.msk [vmem:[%s639 + $0x68] sm:$0xff] %vm640, %v567
        %655 = vst.msk [vmem:[%s639 + $0x70] sm:$0xff] %vm640, %v572
        %656 = vst.msk [vmem:[%s639 + $0x78] sm:$0xff] %vm640, %v575
        %p657 = scmp.gt.s32.totalorder %s32, 0
        %s658 = scalar_select %p657, 1, 0
        %s659 = scvt.s32.f32 %s658
        %p660 = scmp.lt.s32.totalorder %s32, 1
        %s661 = scalar_select %p660, 1, 0
        %s662 = scvt.s32.f32 %s661
        %v663 = vstv %s659
        %v664 = vmul.f32 %v625, %v663
        %v665 = vmul.f32 %v628, %v663
        %666 = vst.msk [vmem:[#allocation2] sm:$0xff] %vm640, %v664
        %667 = vst.msk [vmem:[#allocation2 + $0x8] sm:$0xff] %vm640, %v665
        %v668 = vstv %s662
        %v669 = vmul.f32 %v633, %v668
        %v670 = vmul.f32 %v636, %v668
        %s671 = scalar_lea.vmem [#allocation2], 144
        %672 = vst.msk [vmem:[%s671] sm:$0xff] %vm640, %v669
        %673 = vst.msk [vmem:[%s671 + $0x8] sm:$0xff] %vm640, %v670
        %v674 = vld [vmem:[#allocation9] sm:$0xff]
        %v675 = vld [vmem:[#allocation9 + $0x8] sm:$0x1]
        %v676 = vld [vmem:[%s5] sm:$0x1]
        %v677 = vld [vmem:[#allocation2] sm:$0xff]
        %v678 = vld [vmem:[#allocation2 + $0x8] sm:$0xff]
        %v679 = vld [vmem:[#allocation2 + $0x10] sm:$0xff]
        %v680 = vld [vmem:[#allocation2 + $0x18] sm:$0xff]
        %v681 = vld [vmem:[#allocation2 + $0x20] sm:$0xff]
        %v682 = vld [vmem:[#allocation2 + $0x28] sm:$0xff]
        %v683 = vld [vmem:[#allocation2 + $0x30] sm:$0xff]
        %v684 = vld [vmem:[#allocation2 + $0x38] sm:$0xff]
        %v685 = vld [vmem:[#allocation2 + $0x40] sm:$0xff]
        %v686 = vld [vmem:[#allocation2 + $0x48] sm:$0xff]
        %v687 = vld [vmem:[#allocation2 + $0x50] sm:$0xff]
        %v688 = vld [vmem:[#allocation2 + $0x58] sm:$0xff]
        %v689 = vld [vmem:[#allocation2 + $0x60] sm:$0xff]
        %v690 = vld [vmem:[#allocation2 + $0x68] sm:$0xff]
        %v691 = vld [vmem:[#allocation2 + $0x70] sm:$0xff]
        %v692 = vld [vmem:[#allocation2 + $0x78] sm:$0xff]
        %v693 = vld [vmem:[%s639] sm:$0xff]
        %v694 = vld [vmem:[%s639 + $0x8] sm:$0xff]
        %v695 = vld [vmem:[%s639 + $0x10] sm:$0xff]
        %v696 = vld [vmem:[%s639 + $0x18] sm:$0xff]
        %v697 = vld [vmem:[%s639 + $0x20] sm:$0xff]
        %v698 = vld [vmem:[%s639 + $0x28] sm:$0xff]
        %v699 = vld [vmem:[%s639 + $0x30] sm:$0xff]
        %v700 = vld [vmem:[%s639 + $0x38] sm:$0xff]
        %v701 = vld [vmem:[%s639 + $0x40] sm:$0xff]
        %v702 = vld [vmem:[%s639 + $0x48] sm:$0xff]
        %v703 = vld [vmem:[%s639 + $0x50] sm:$0xff]
        %v704 = vld [vmem:[%s639 + $0x58] sm:$0xff]
        %v705 = vld [vmem:[%s639 + $0x60] sm:$0xff]
        %v706 = vld [vmem:[%s639 + $0x68] sm:$0xff]
        %v707 = vld [vmem:[%s639 + $0x70] sm:$0xff]
        %v708 = vld [vmem:[%s639 + $0x78] sm:$0xff]
        %s709 = scalar_lea.vmem [#allocation2], 32
        %v710 = vld [vmem:[%s709] sm:$0xff]
        %v711 = vld [vmem:[%s709 + $0x8] sm:$0xff]
        %v712 = vld [vmem:[%s709 + $0x10] sm:$0xff]
        %v713 = vld [vmem:[%s709 + $0x18] sm:$0xff]
        %v714 = vld [vmem:[%s709 + $0x20] sm:$0xff]
        %v715 = vld [vmem:[%s709 + $0x28] sm:$0xff]
        %v716 = vld [vmem:[%s709 + $0x30] sm:$0xff]
        %v717 = vld [vmem:[%s709 + $0x38] sm:$0xff]
        %v718 = vld [vmem:[%s709 + $0x40] sm:$0xff]
        %v719 = vld [vmem:[%s709 + $0x48] sm:$0xff]
        %v720 = vld [vmem:[%s709 + $0x50] sm:$0xff]
        %v721 = vld [vmem:[%s709 + $0x58] sm:$0xff]
        %v722 = vld [vmem:[%s709 + $0x60] sm:$0xff]
        %v723 = vld [vmem:[%s709 + $0x68] sm:$0xff]
        %v724 = vld [vmem:[%s709 + $0x70] sm:$0xff]
        %v725 = vld [vmem:[%s709 + $0x78] sm:$0xff]
        %v726 = vlaneseq
        %v727 = vshrl.u32 %v726, 7
        %v728 = vsub.s32 1, %v727
        %v729 = vrot.slane %v674, %v728
        %v730 = vmul.f32 %v677, %v729
        %v731 = vmul.f32 %v678, %v729
        %v732 = vmul.f32 %v679, %v729
        %v733 = vmul.f32 %v680, %v729
        %v734 = vmul.f32 %v681, %v729
        %v735 = vmul.f32 %v682, %v729
        %v736 = vmul.f32 %v683, %v729
        %v737 = vmul.f32 %v684, %v729
        %v738 = vmul.f32 %v685, %v729
        %v739 = vmul.f32 %v686, %v729
        %v740 = vmul.f32 %v687, %v729
        %v741 = vmul.f32 %v688, %v729
        %v742 = vmul.f32 %v689, %v729
        %v743 = vmul.f32 %v690, %v729
        %v744 = vmul.f32 %v691, %v729
        %v745 = vmul.f32 %v692, %v729
        %v746 = vlaneseq
        %v747 = vshrl.u32 %v746, 7
        %v748 = vsub.s32 4, %v747
        %v749 = vrot.slane %v674, %v748
        %v750 = vmul.f32 %v693, %v749
        %v751 = vmul.f32 %v694, %v749
        %v752 = vmul.f32 %v695, %v749
        %v753 = vmul.f32 %v696, %v749
        %v754 = vmul.f32 %v697, %v749
        %v755 = vmul.f32 %v698, %v749
        %v756 = vmul.f32 %v699, %v749
        %v757 = vmul.f32 %v700, %v749
        %v758 = vmul.f32 %v701, %v749
        %v759 = vmul.f32 %v702, %v749
        %v760 = vmul.f32 %v703, %v749
        %v761 = vmul.f32 %v704, %v749
        %v762 = vmul.f32 %v705, %v749
        %v763 = vmul.f32 %v706, %v749
        %v764 = vmul.f32 %v707, %v749
        %v765 = vmul.f32 %v708, %v749
        %v766 = vadd.f32 %v730, %v750
        %v767 = vadd.f32 %v731, %v751
        %v768 = vadd.f32 %v732, %v752
        %v769 = vadd.f32 %v733, %v753
        %v770 = vadd.f32 %v734, %v754
        %v771 = vadd.f32 %v735, %v755
        %v772 = vadd.f32 %v736, %v756
        %v773 = vadd.f32 %v737, %v757
        %v774 = vadd.f32 %v738, %v758
        %v775 = vadd.f32 %v739, %v759
        %v776 = vadd.f32 %v740, %v760
        %v777 = vadd.f32 %v741, %v761
        %v778 = vadd.f32 %v742, %v762
        %v779 = vadd.f32 %v743, %v763
        %v780 = vadd.f32 %v744, %v764
        %v781 = vadd.f32 %v745, %v765
        %v782 = vlaneseq
        %v783 = vshrl.u32 %v782, 7
        %v784 = vsub.s32 7, %v783
        %v785 = vrot.slane %v674, %v784
        %v786 = vmul.f32 %v710, %v785
        %v787 = vmul.f32 %v711, %v785
        %v788 = vmul.f32 %v712, %v785
        %v789 = vmul.f32 %v713, %v785
        %v790 = vmul.f32 %v714, %v785
        %v791 = vmul.f32 %v715, %v785
        %v792 = vmul.f32 %v716, %v785
        %v793 = vmul.f32 %v717, %v785
        %v794 = vmul.f32 %v718, %v785
        %v795 = vmul.f32 %v719, %v785
        %v796 = vmul.f32 %v720, %v785
        %v797 = vmul.f32 %v721, %v785
        %v798 = vmul.f32 %v722, %v785
        %v799 = vmul.f32 %v723, %v785
        %v800 = vmul.f32 %v724, %v785
        %v801 = vmul.f32 %v725, %v785
        %v802 = vadd.f32 %v766, %v786
        %v803 = vadd.f32 %v767, %v787
        %v804 = vadd.f32 %v768, %v788
        %v805 = vadd.f32 %v769, %v789
        %v806 = vadd.f32 %v770, %v790
        %v807 = vadd.f32 %v771, %v791
        %v808 = vadd.f32 %v772, %v792
        %v809 = vadd.f32 %v773, %v793
        %v810 = vadd.f32 %v774, %v794
        %v811 = vadd.f32 %v775, %v795
        %v812 = vadd.f32 %v776, %v796
        %v813 = vadd.f32 %v777, %v797
        %v814 = vadd.f32 %v778, %v798
        %v815 = vadd.f32 %v779, %v799
        %v816 = vadd.f32 %v780, %v800
        %v817 = vadd.f32 %v781, %v801
        %v819 = vlaneseq
        %v820 = vshrl.u32 %v819, 7
        %v821 = vsub.s32 0, %v820
        %v822 = vrot.slane %v676, %v821
        %v824 = vadd.f32 %v802, %v822
        %v825 = vadd.f32 %v803, %v822
        %v826 = vadd.f32 %v804, %v822
        %v827 = vadd.f32 %v805, %v822
        %v828 = vadd.f32 %v806, %v822
        %v829 = vadd.f32 %v807, %v822
        %v830 = vadd.f32 %v808, %v822
        %v831 = vadd.f32 %v809, %v822
        %v832 = vadd.f32 %v810, %v822
        %v833 = vadd.f32 %v811, %v822
        %v834 = vadd.f32 %v812, %v822
        %v835 = vadd.f32 %v813, %v822
        %v836 = vadd.f32 %v814, %v822
        %v837 = vadd.f32 %v815, %v822
        %v838 = vadd.f32 %v816, %v822
        %v839 = vadd.f32 %v817, %v822
        %v840 = vlaneseq
        %v841 = vshrl.u32 %v840, 7
        %v842 = vadd.s32 %v841, 8
        %v843 = vlaneseq
        %v844 = vshrl.u32 %v843, 7
        %v845 = vsub.s32 0, %v844
        %v846 = vrot.slane %v674, %v845
        %v847 = vmul.f32 %v677, %v846
        %v848 = vmul.f32 %v678, %v846
        %v849 = vmul.f32 %v679, %v846
        %v850 = vmul.f32 %v680, %v846
        %v851 = vmul.f32 %v681, %v846
        %v852 = vmul.f32 %v682, %v846
        %v853 = vmul.f32 %v683, %v846
        %v854 = vmul.f32 %v684, %v846
        %v855 = vmul.f32 %v685, %v846
        %v856 = vmul.f32 %v686, %v846
        %v857 = vmul.f32 %v687, %v846
        %v858 = vmul.f32 %v688, %v846
        %v859 = vmul.f32 %v689, %v846
        %v860 = vmul.f32 %v690, %v846
        %v861 = vmul.f32 %v691, %v846
        %v862 = vmul.f32 %v692, %v846
        %v863 = vlaneseq
        %v864 = vshrl.u32 %v863, 7
        %v865 = vsub.s32 3, %v864
        %v866 = vrot.slane %v674, %v865
        %v867 = vmul.f32 %v693, %v866
        %v868 = vmul.f32 %v694, %v866
        %v869 = vmul.f32 %v695, %v866
        %v870 = vmul.f32 %v696, %v866
        %v871 = vmul.f32 %v697, %v866
        %v872 = vmul.f32 %v698, %v866
        %v873 = vmul.f32 %v699, %v866
        %v874 = vmul.f32 %v700, %v866
        %v875 = vmul.f32 %v701, %v866
        %v876 = vmul.f32 %v702, %v866
        %v877 = vmul.f32 %v703, %v866
        %v878 = vmul.f32 %v704, %v866
        %v879 = vmul.f32 %v705, %v866
        %v880 = vmul.f32 %v706, %v866
        %v881 = vmul.f32 %v707, %v866
        %v882 = vmul.f32 %v708, %v866
        %v883 = vadd.f32 %v847, %v867
        %v884 = vadd.f32 %v848, %v868
        %v885 = vadd.f32 %v849, %v869
        %v886 = vadd.f32 %v850, %v870
        %v887 = vadd.f32 %v851, %v871
        %v888 = vadd.f32 %v852, %v872
        %v889 = vadd.f32 %v853, %v873
        %v890 = vadd.f32 %v854, %v874
        %v891 = vadd.f32 %v855, %v875
        %v892 = vadd.f32 %v856, %v876
        %v893 = vadd.f32 %v857, %v877
        %v894 = vadd.f32 %v858, %v878
        %v895 = vadd.f32 %v859, %v879
        %v896 = vadd.f32 %v860, %v880
        %v897 = vadd.f32 %v861, %v881
        %v898 = vadd.f32 %v862, %v882
        %v899 = vlaneseq
        %v900 = vshrl.u32 %v899, 7
        %v901 = vsub.s32 6, %v900
        %v902 = vrot.slane %v674, %v901
        %v903 = vmul.f32 %v710, %v902
        %v904 = vmul.f32 %v711, %v902
        %v905 = vmul.f32 %v712, %v902
        %v906 = vmul.f32 %v713, %v902
        %v907 = vmul.f32 %v714, %v902
        %v908 = vmul.f32 %v715, %v902
        %v909 = vmul.f32 %v716, %v902
        %v910 = vmul.f32 %v717, %v902
        %v911 = vmul.f32 %v718, %v902
        %v912 = vmul.f32 %v719, %v902
        %v913 = vmul.f32 %v720, %v902
        %v914 = vmul.f32 %v721, %v902
        %v915 = vmul.f32 %v722, %v902
        %v916 = vmul.f32 %v723, %v902
        %v917 = vmul.f32 %v724, %v902
        %v918 = vmul.f32 %v725, %v902
        %v919 = vadd.f32 %v883, %v903
        %v920 = vadd.f32 %v884, %v904
        %v921 = vadd.f32 %v885, %v905
        %v922 = vadd.f32 %v886, %v906
        %v923 = vadd.f32 %v887, %v907
        %v924 = vadd.f32 %v888, %v908
        %v925 = vadd.f32 %v889, %v909
        %v926 = vadd.f32 %v890, %v910
        %v927 = vadd.f32 %v891, %v911
        %v928 = vadd.f32 %v892, %v912
        %v929 = vadd.f32 %v893, %v913
        %v930 = vadd.f32 %v894, %v914
        %v931 = vadd.f32 %v895, %v915
        %v932 = vadd.f32 %v896, %v916
        %v933 = vadd.f32 %v897, %v917
        %v934 = vadd.f32 %v898, %v918
        %v935 = vrot.slane %v919, 7
        %v936 = vrot.slane %v921, 7
        %v937 = vrot.slane %v923, 7
        %v938 = vrot.slane %v925, 7
        %v939 = vrot.slane %v927, 7
        %v940 = vrot.slane %v929, 7
        %v941 = vrot.slane %v931, 7
        %v942 = vrot.slane %v933, 7
        %v943 = vrot.slane %v920, 7
        %v944 = vrot.slane %v922, 7
        %v945 = vrot.slane %v924, 7
        %v946 = vrot.slane %v926, 7
        %v947 = vrot.slane %v928, 7
        %v948 = vrot.slane %v930, 7
        %v949 = vrot.slane %v932, 7
        %v950 = vrot.slane %v934, 7
        %vm951 = vcmp.lt.s32.totalorder %v841, 1
        %v952 = vsel %vm951, %v935, %v943
        %v953 = vsel %vm951, %v936, %v944
        %v954 = vsel %vm951, %v937, %v945
        %v955 = vsel %vm951, %v938, %v946
        %v956 = vsel %vm951, %v939, %v947
        %v957 = vsel %vm951, %v940, %v948
        %v958 = vsel %vm951, %v941, %v949
        %v959 = vsel %vm951, %v942, %v950
        %v960 = vsel %vm951, %v943, %v935
        %v961 = vsel %vm951, %v944, %v936
        %v962 = vsel %vm951, %v945, %v937
        %v963 = vsel %vm951, %v946, %v938
        %v964 = vsel %vm951, %v947, %v939
        %v965 = vsel %vm951, %v948, %v940
        %v966 = vsel %vm951, %v949, %v941
        %v967 = vsel %vm951, %v950, %v942
        %vm968 = vcmp.eq.s32.totalorder %v841, 0
        %vm969 = vcmp.eq.s32.totalorder %v842, 0
        %v970 = vsel %vm968, 0.0, %v960
        %v971 = vsel %vm969, 0.0, %v952
        %v972 = vsel %vm968, 0.0, %v961
        %v973 = vsel %vm969, 0.0, %v953
        %v974 = vsel %vm968, 0.0, %v962
        %v975 = vsel %vm969, 0.0, %v954
        %v976 = vsel %vm968, 0.0, %v963
        %v977 = vsel %vm969, 0.0, %v955
        %v978 = vsel %vm968, 0.0, %v964
        %v979 = vsel %vm969, 0.0, %v956
        %v980 = vsel %vm968, 0.0, %v965
        %v981 = vsel %vm969, 0.0, %v957
        %v982 = vsel %vm968, 0.0, %v966
        %v983 = vsel %vm969, 0.0, %v958
        %v984 = vsel %vm968, 0.0, %v967
        %v985 = vsel %vm969, 0.0, %v959
        %v986 = vadd.f32 %v824, %v970
        %v987 = vadd.f32 %v825, %v971
        %v988 = vadd.f32 %v826, %v972
        %v989 = vadd.f32 %v827, %v973
        %v990 = vadd.f32 %v828, %v974
        %v991 = vadd.f32 %v829, %v975
        %v992 = vadd.f32 %v830, %v976
        %v993 = vadd.f32 %v831, %v977
        %v994 = vadd.f32 %v832, %v978
        %v995 = vadd.f32 %v833, %v979
        %v996 = vadd.f32 %v834, %v980
        %v997 = vadd.f32 %v835, %v981
        %v998 = vadd.f32 %v836, %v982
        %v999 = vadd.f32 %v837, %v983
        %v1000 = vadd.f32 %v838, %v984
        %v1001 = vadd.f32 %v839, %v985
        %v1002 = vlaneseq
        %v1003 = vshrl.u32 %v1002, 7
        %v1004 = vsub.s32 2, %v1003
        %v1005 = vrot.slane %v674, %v1004
        %v1006 = vmul.f32 %v677, %v1005
        %v1007 = vmul.f32 %v678, %v1005
        %v1008 = vmul.f32 %v679, %v1005
        %v1009 = vmul.f32 %v680, %v1005
        %v1010 = vmul.f32 %v681, %v1005
        %v1011 = vmul.f32 %v682, %v1005
        %v1012 = vmul.f32 %v683, %v1005
        %v1013 = vmul.f32 %v684, %v1005
        %v1014 = vmul.f32 %v685, %v1005
        %v1015 = vmul.f32 %v686, %v1005
        %v1016 = vmul.f32 %v687, %v1005
        %v1017 = vmul.f32 %v688, %v1005
        %v1018 = vmul.f32 %v689, %v1005
        %v1019 = vmul.f32 %v690, %v1005
        %v1020 = vmul.f32 %v691, %v1005
        %v1021 = vmul.f32 %v692, %v1005
        %v1022 = vlaneseq
        %v1023 = vshrl.u32 %v1022, 7
        %v1024 = vsub.s32 5, %v1023
        %v1025 = vrot.slane %v674, %v1024
        %v1026 = vmul.f32 %v693, %v1025
        %v1027 = vmul.f32 %v694, %v1025
        %v1028 = vmul.f32 %v695, %v1025
        %v1029 = vmul.f32 %v696, %v1025
        %v1030 = vmul.f32 %v697, %v1025
        %v1031 = vmul.f32 %v698, %v1025
        %v1032 = vmul.f32 %v699, %v1025
        %v1033 = vmul.f32 %v700, %v1025
        %v1034 = vmul.f32 %v701, %v1025
        %v1035 = vmul.f32 %v702, %v1025
        %v1036 = vmul.f32 %v703, %v1025
        %v1037 = vmul.f32 %v704, %v1025
        %v1038 = vmul.f32 %v705, %v1025
        %v1039 = vmul.f32 %v706, %v1025
        %v1040 = vmul.f32 %v707, %v1025
        %v1041 = vmul.f32 %v708, %v1025
        %v1042 = vadd.f32 %v1006, %v1026
        %v1043 = vadd.f32 %v1007, %v1027
        %v1044 = vadd.f32 %v1008, %v1028
        %v1045 = vadd.f32 %v1009, %v1029
        %v1046 = vadd.f32 %v1010, %v1030
        %v1047 = vadd.f32 %v1011, %v1031
        %v1048 = vadd.f32 %v1012, %v1032
        %v1049 = vadd.f32 %v1013, %v1033
        %v1050 = vadd.f32 %v1014, %v1034
        %v1051 = vadd.f32 %v1015, %v1035
        %v1052 = vadd.f32 %v1016, %v1036
        %v1053 = vadd.f32 %v1017, %v1037
        %v1054 = vadd.f32 %v1018, %v1038
        %v1055 = vadd.f32 %v1019, %v1039
        %v1056 = vadd.f32 %v1020, %v1040
        %v1057 = vadd.f32 %v1021, %v1041
        %v1058 = vlaneseq
        %v1059 = vshrl.u32 %v1058, 7
        %v1060 = vsub.s32 0, %v1059
        %v1061 = vrot.slane %v675, %v1060
        %v1062 = vmul.f32 %v710, %v1061
        %v1063 = vmul.f32 %v711, %v1061
        %v1064 = vmul.f32 %v712, %v1061
        %v1065 = vmul.f32 %v713, %v1061
        %v1066 = vmul.f32 %v714, %v1061
        %v1067 = vmul.f32 %v715, %v1061
        %v1068 = vmul.f32 %v716, %v1061
        %v1069 = vmul.f32 %v717, %v1061
        %v1070 = vmul.f32 %v718, %v1061
        %v1071 = vmul.f32 %v719, %v1061
        %v1072 = vmul.f32 %v720, %v1061
        %v1073 = vmul.f32 %v721, %v1061
        %v1074 = vmul.f32 %v722, %v1061
        %v1075 = vmul.f32 %v723, %v1061
        %v1076 = vmul.f32 %v724, %v1061
        %v1077 = vmul.f32 %v725, %v1061
        %v1078 = vadd.f32 %v1042, %v1062
        %v1079 = vadd.f32 %v1043, %v1063
        %v1080 = vadd.f32 %v1044, %v1064
        %v1081 = vadd.f32 %v1045, %v1065
        %v1082 = vadd.f32 %v1046, %v1066
        %v1083 = vadd.f32 %v1047, %v1067
        %v1084 = vadd.f32 %v1048, %v1068
        %v1085 = vadd.f32 %v1049, %v1069
        %v1086 = vadd.f32 %v1050, %v1070
        %v1087 = vadd.f32 %v1051, %v1071
        %v1088 = vadd.f32 %v1052, %v1072
        %v1089 = vadd.f32 %v1053, %v1073
        %v1090 = vadd.f32 %v1054, %v1074
        %v1091 = vadd.f32 %v1055, %v1075
        %v1092 = vadd.f32 %v1056, %v1076
        %v1093 = vadd.f32 %v1057, %v1077
        %v1094 = vrot.slane %v1078, 1
        %v1095 = vrot.slane %v1080, 1
        %v1096 = vrot.slane %v1082, 1
        %v1097 = vrot.slane %v1084, 1
        %v1098 = vrot.slane %v1086, 1
        %v1099 = vrot.slane %v1088, 1
        %v1100 = vrot.slane %v1090, 1
        %v1101 = vrot.slane %v1092, 1
        %v1102 = vrot.slane %v1079, 1
        %v1103 = vrot.slane %v1081, 1
        %v1104 = vrot.slane %v1083, 1
        %v1105 = vrot.slane %v1085, 1
        %v1106 = vrot.slane %v1087, 1
        %v1107 = vrot.slane %v1089, 1
        %v1108 = vrot.slane %v1091, 1
        %v1109 = vrot.slane %v1093, 1
        %vm1110 = vcmp.lt.s32.totalorder %v841, 7
        %v1111 = vsel %vm1110, %v1094, %v1102
        %v1112 = vsel %vm1110, %v1095, %v1103
        %v1113 = vsel %vm1110, %v1096, %v1104
        %v1114 = vsel %vm1110, %v1097, %v1105
        %v1115 = vsel %vm1110, %v1098, %v1106
        %v1116 = vsel %vm1110, %v1099, %v1107
        %v1117 = vsel %vm1110, %v1100, %v1108
        %v1118 = vsel %vm1110, %v1101, %v1109
        %v1119 = vsel %vm1110, %v1102, %v1094
        %v1120 = vsel %vm1110, %v1103, %v1095
        %v1121 = vsel %vm1110, %v1104, %v1096
        %v1122 = vsel %vm1110, %v1105, %v1097
        %v1123 = vsel %vm1110, %v1106, %v1098
        %v1124 = vsel %vm1110, %v1107, %v1099
        %v1125 = vsel %vm1110, %v1108, %v1100
        %v1126 = vsel %vm1110, %v1109, %v1101
        %vm1127 = vcmp.eq.s32.totalorder %v841, 15
        %vm1128 = vcmp.eq.s32.totalorder %v842, 15
        %v1129 = vsel %vm1127, 0.0, %v1111
        %v1130 = vsel %vm1128, 0.0, %v1119
        %v1131 = vsel %vm1127, 0.0, %v1112
        %v1132 = vsel %vm1128, 0.0, %v1120
        %v1133 = vsel %vm1127, 0.0, %v1113
        %v1134 = vsel %vm1128, 0.0, %v1121
        %v1135 = vsel %vm1127, 0.0, %v1114
        %v1136 = vsel %vm1128, 0.0, %v1122
        %v1137 = vsel %vm1127, 0.0, %v1115
        %v1138 = vsel %vm1128, 0.0, %v1123
        %v1139 = vsel %vm1127, 0.0, %v1116
        %v1140 = vsel %vm1128, 0.0, %v1124
        %v1141 = vsel %vm1127, 0.0, %v1117
        %v1142 = vsel %vm1128, 0.0, %v1125
        %v1143 = vsel %vm1127, 0.0, %v1118
        %v1144 = vsel %vm1128, 0.0, %v1126
        %v1145 = vadd.f32 %v986, %v1129
        %v1146 = vadd.f32 %v987, %v1130
        %v1147 = vadd.f32 %v988, %v1131
        %v1148 = vadd.f32 %v989, %v1132
        %v1149 = vadd.f32 %v990, %v1133
        %v1150 = vadd.f32 %v991, %v1134
        %v1151 = vadd.f32 %v992, %v1135
        %v1152 = vadd.f32 %v993, %v1136
        %v1153 = vadd.f32 %v994, %v1137
        %v1154 = vadd.f32 %v995, %v1138
        %v1155 = vadd.f32 %v996, %v1139
        %v1156 = vadd.f32 %v997, %v1140
        %v1157 = vadd.f32 %v998, %v1141
        %v1158 = vadd.f32 %v999, %v1142
        %v1159 = vadd.f32 %v1000, %v1143
        %v1160 = vadd.f32 %v1001, %v1144
        %v1161 = vmax.f32 %v1145, 0.0
        %v1162 = vmax.f32 %v1146, 0.0
        %v1163 = vmax.f32 %v1147, 0.0
        %v1164 = vmax.f32 %v1148, 0.0
        %v1165 = vmax.f32 %v1149, 0.0
        %v1166 = vmax.f32 %v1150, 0.0
        %v1167 = vmax.f32 %v1151, 0.0
        %v1168 = vmax.f32 %v1152, 0.0
        %v1169 = vmax.f32 %v1153, 0.0
        %v1170 = vmax.f32 %v1154, 0.0
        %v1171 = vmax.f32 %v1155, 0.0
        %v1172 = vmax.f32 %v1156, 0.0
        %v1173 = vmax.f32 %v1157, 0.0
        %v1174 = vmax.f32 %v1158, 0.0
        %v1175 = vmax.f32 %v1159, 0.0
        %v1176 = vmax.f32 %v1160, 0.0
        %1177 = vst.msk [vmem:[%s412] sm:$0xff] %vm640, %v1161
        %1178 = vst.msk [vmem:[%s412 + $0x8] sm:$0xff] %vm640, %v1162
        %1179 = vst.msk [vmem:[%s412 + $0x10] sm:$0xff] %vm640, %v1163
        %1180 = vst.msk [vmem:[%s412 + $0x18] sm:$0xff] %vm640, %v1164
        %1181 = vst.msk [vmem:[%s412 + $0x20] sm:$0xff] %vm640, %v1165
        %1182 = vst.msk [vmem:[%s412 + $0x28] sm:$0xff] %vm640, %v1166
        %1183 = vst.msk [vmem:[%s412 + $0x30] sm:$0xff] %vm640, %v1167
        %1184 = vst.msk [vmem:[%s412 + $0x38] sm:$0xff] %vm640, %v1168
        %1185 = vst.msk [vmem:[%s412 + $0x40] sm:$0xff] %vm640, %v1169
        %1186 = vst.msk [vmem:[%s412 + $0x48] sm:$0xff] %vm640, %v1170
        %1187 = vst.msk [vmem:[%s412 + $0x50] sm:$0xff] %vm640, %v1171
        %1188 = vst.msk [vmem:[%s412 + $0x58] sm:$0xff] %vm640, %v1172
        %1189 = vst.msk [vmem:[%s412 + $0x60] sm:$0xff] %vm640, %v1173
        %1190 = vst.msk [vmem:[%s412 + $0x68] sm:$0xff] %vm640, %v1174
        %1191 = vst.msk [vmem:[%s412 + $0x70] sm:$0xff] %vm640, %v1175
        %1192 = vst.msk [vmem:[%s412 + $0x78] sm:$0xff] %vm640, %v1176
        %s1193 = sand.u32 %s212, 1
        %s1194 = scalar_lea.sflag [#allocation5], %s1193
        %s1195 = sand.u32 %s212, 1
        %s1196 = smul.addr %s1195, 128
        %s1197 = scalar_lea.vmem [#allocation11], %s1196
        // Predicated region
        $region61: #{tpu_custom_call.1} parent=43 // pred_check
          %p1198 = pneg %p222
        $region62: #{tpu_custom_call.1} parent=43 // pred_check_branch
          %1200 = sbr.rel (%p1198) target = $region64
        $region63: #{tpu_custom_call.1} parent=43 // pred_region
          %s1201 = smul.u32 8, %s32
          %s1203 = ssub.s32 2048, 2048
          %1204 = vsyncadd %s1194, %s1203
          %s1205 = smul.addr %s1201, 2
          %s1206 = smul.addr %s31, 32
          %s1207 = sadd.s32 %s1205, %s1206
          %s1208 = smul.addr %s1207, 128
          %s1209 = scalar_lea.hbm %s6, %s1208
          %s1210 = sshll.u32 %s1197, 4
          %s1211 = int_to_ptr.vmem [resolvable:$true] %s1210
          %1216 = dma.vmem_to_hbm [thread:$0]  %s1211, 2048, %s1209, %s1194, 128, 128, 8
        $region64: #{tpu_custom_call.1} parent=43 // pred_fallthru
          _
      $region44: #{tpu_custom_call.1} parent=5 // pred_fallthru
        _
      %p1217 = scmp.le.s32.totalorder 2, %s22
      // Predicated region
      $region65: #{tpu_custom_call.1} parent=5 // pred_check
        %p1218 = pneg %p1217
      $region66: #{tpu_custom_call.1} parent=5 // pred_check_branch
        %1220 = sbr.rel (%p1218) target = $region68
      $region67: #{tpu_custom_call.1} parent=5 // pred_region
        %s1221 = ssub.s32 %s22, 2
        // Predicated region
        $region69: #{tpu_custom_call.1} parent=67 // pred_check
          %p1222 = pneg %p228
        $region70: #{tpu_custom_call.1} parent=67 // pred_check_branch
          %1224 = sbr.rel (%p1222) target = $region72
        $region71: #{tpu_custom_call.1} parent=67 // pred_region
          %s1225 = sand.u32 %s213, 1
          %s1226 = scalar_lea.sflag [#allocation5], %s1225
          %s1227 = sand.u32 %s213, 1
          %s1228 = smul.addr %s1227, 128
          %s1229 = scalar_lea.vmem [#allocation11], %s1228
          %1230 = dma.done %s1226, 2048
        $region72: #{tpu_custom_call.1} parent=67 // pred_fallthru
          _
      $region68: #{tpu_custom_call.1} parent=5 // pred_fallthru
        _
    $region6: #{tpu_custom_call.1} parent=1 // loop_footer
      %s26 = sadd.s32 1, %s22
    $region7: #{tpu_custom_call.1} parent=1 // loop_footer_branch
      %21 = sbr.rel target = $region3
    $region8: #{tpu_custom_call.1} parent=1 // loop_exit
      _
    %1231 = vsyncpa [#allocation4], 1
    %s1232 = scalar_lea.sflag [#allocation4], 1
    %1233 = vsyncpa %s1232, 1
    %1234 = vsyncpa [#allocation7], 1
    %s1235 = scalar_lea.sflag [#allocation7], 1
    %1236 = vsyncpa %s1235, 1
    %1237 = vsyncpa [#allocation10], 1
    %1238 = vsyncpa [#allocation5], 1
    %s1239 = scalar_lea.sflag [#allocation5], 1
    %1240 = vsyncpa %s1239, 1

</llo_original>
